<compile_context>
chip_gen: v7x
topology: tpu7x:2x2x1
jax: 0.10.0
libtpu: 0.0.40
codegen_flags: <defaults>
</compile_context>

<pallas_src>
import jax
import jax.numpy as jnp
from jax.experimental import pallas as pl
from jax.experimental.pallas import tpu as pltpu


def _pick_batch_tile(B):
    # Output block is (TB, Od): TB must be a multiple of 8 or equal the full batch.
    # Prefer small TB -> many grid steps (pipelining + v7x dual-TC split).
    return 8 if B % 8 == 0 else B


def _pick_row_chunk(HW, TB, max_gemm_rows=4096):
    # Rows of the (H*W, 9C) im2col map per grid step, per image.  Keeps the
    # (TB*R, 512) f32 pre-pool activation to a few MiB while amortizing per-step
    # overhead.  R must divide H*W and be sublane aligned (prefer bf16 tile 16).
    target = max(8, max_gemm_rows // max(TB, 1))
    if HW <= target:
        return HW
    for align in (16, 8):
        for r in range(target - (target % align), align - 1, -align):
            if HW % r == 0:
                return r
    return HW  # fallback: whole image per step (still correct).


def _pick_vmem_limit():
    # ~3/4 of physical VMEM, capped at 100 MiB: ~48 MiB on v7x (64 MiB VMEM),
    # ~96 MiB on v5e/v6e (128 MiB VMEM).
    cap = 64 * 1024 * 1024
    try:
        cap = int(pltpu.get_tpu_info().vmem_capacity_bytes)
    except Exception:
        pass
    return int(min(100 * 1024 * 1024, max(32 * 1024 * 1024, (cap * 3) // 4)))


def _make_moco_kernel(*, TB, R, KC, F, n_chunks, inv_hw):
    def kernel(x_ref, cw_ref, cb_ref, w1_ref, b1_ref, w2_ref, b2_ref, o_ref, acc_ref):
        j = pl.program_id(1)

        @pl.when(j == 0)
        def _():
            acc_ref[...] = jnp.zeros_like(acc_ref)

        # Conv3x3 for this row strip, all TB images at once, as ONE K=9C GEMM.
        lhs = x_ref[...].reshape(TB * R, KC)                       # bf16, lane-dense
        y = jnp.dot(lhs, cw_ref[...], preferred_element_type=jnp.float32)
        y = jnp.maximum(y + cb_ref[...], 0.0)                      # bias + ReLU (f32)
        acc_ref[...] += y.reshape(TB, R, F).sum(axis=1)            # GAP partial sums

        # Fused MoCoProjectionHead epilogue on the last row chunk (VMEM-resident).
        @pl.when(j == n_chunks - 1)
        def _():
            feats = acc_ref[...] * inv_hw                          # finalize GAP
            h = jnp.dot(feats.astype(jnp.bfloat16), w1_ref[...],
                        preferred_element_type=jnp.float32)
            h = jnp.maximum(h + b1_ref[...], 0.0)
            o = jnp.dot(h.astype(jnp.bfloat16), w2_ref[...],
                        preferred_element_type=jnp.float32)
            o_ref[...] = (o + b2_ref[...]).astype(o_ref.dtype)

    return kernel


def moco_forward(params, x_nchw):
    conv_w, conv_b = params["conv_w"], params["conv_b"]
    w1, b1, w2, b2 = params["w1"], params["b1"], params["w2"], params["b2"]
    F, Hd, Od = conv_w.shape[-1], w1.shape[-1], w2.shape[-1]

    B, C, H, W = x_nchw.shape
    HW, KC = H * W, 9 * C

    # NCHW -> NHWC, cast to bf16 *before* pad/im2col (halves wrapper-side bytes).
    x = jnp.transpose(x_nchw, (0, 2, 3, 1)).astype(jnp.bfloat16)
    xpad = jnp.pad(x, ((0, 0), (1, 1), (1, 1), (0, 0)))
    # Lane-dense im2col: (B, H*W, 9*C); tap ordering dy-major matches conv_w packing.
    patches = jnp.concatenate(
        [xpad[:, dy:dy + H, dx:dx + W, :] for dy in range(3) for dx in range(3)],
        axis=-1)
    xflat = patches.reshape(B, HW, KC)

    TB = _pick_batch_tile(B)
    R = _pick_row_chunk(HW, TB)
    n_chunks = HW // R

    kernel = _make_moco_kernel(TB=TB, R=R, KC=KC, F=F,
                               n_chunks=n_chunks, inv_hw=1.0 / float(HW))

    return pl.pallas_call(
        kernel,
        out_shape=jax.ShapeDtypeStruct((B, Od), jnp.float32),
        grid=(B // TB, n_chunks),
        in_specs=[
            pl.BlockSpec((TB, R, KC), lambda i, j: (i, j, 0)),   # im2col row strips
            pl.BlockSpec((KC, F), lambda i, j: (0, 0)),          # packed conv weight
            pl.BlockSpec((1, F), lambda i, j: (0, 0)),           # conv bias
            pl.BlockSpec((F, Hd), lambda i, j: (0, 0)),          # W1
            pl.BlockSpec((1, Hd), lambda i, j: (0, 0)),          # b1
            pl.BlockSpec((Hd, Od), lambda i, j: (0, 0)),         # W2
            pl.BlockSpec((1, Od), lambda i, j: (0, 0)),          # b2
        ],
        out_specs=pl.BlockSpec((TB, Od), lambda i, j: (i, 0)),
        scratch_shapes=[pltpu.VMEM((TB, F), jnp.float32)],       # GAP accumulator
        compiler_params=pltpu.CompilerParams(
            dimension_semantics=("parallel", "arbitrary"),
            vmem_limit_bytes=_pick_vmem_limit(),
        ),
    )(
        xflat,
        conv_w.reshape(KC, F).astype(jnp.bfloat16),
        conv_b.reshape(1, F).astype(jnp.float32),
        w1.astype(jnp.bfloat16),
        b1.reshape(1, Hd).astype(jnp.float32),
        w2.astype(jnp.bfloat16),
        b2.reshape(1, Od).astype(jnp.float32),
    )


def moco_forward_momentum(momentum_params, x_nchw):
    # Frozen momentum encoder + .detach(): stop_gradient around the same forward.
    return jax.lax.stop_gradient(moco_forward(momentum_params, x_nchw))


def init_moco_params(key, in_channels, feat_dim=512, hidden_dim=512, out_dim=128):
    k1, k2, k3 = jax.random.split(key, 3)
    K = 9 * in_channels
    params = {
        "conv_w": jax.random.normal(k1, (9, in_channels, feat_dim), jnp.float32)
                  * (1.0 / K) ** 0.5,
        "conv_b": jnp.zeros((feat_dim,), jnp.float32),
        "w1": jax.random.normal(k2, (feat_dim, hidden_dim), jnp.float32)
              * (1.0 / feat_dim) ** 0.5,
        "b1": jnp.zeros((hidden_dim,), jnp.float32),
        "w2": jax.random.normal(k3, (hidden_dim, out_dim), jnp.float32)
              * (1.0 / hidden_dim) ** 0.5,
        "b2": jnp.zeros((out_dim,), jnp.float32),
    }
    # copy.deepcopy(...) semantics for the momentum branch: identical frozen copies.
    momentum_params = jax.tree_util.tree_map(jnp.copy, params)
    return params, momentum_params


if __name__ == "__main__":
    key = jax.random.PRNGKey(0)
    kx, kp = jax.random.split(key)

    B, C, H, W = 2, 4, 16, 16
    x = jax.random.normal(kx, (B, C, H, W), jnp.float32)

    params, momentum_params = init_moco_params(kp, in_channels=C)

    query = moco_forward(params, x)
    key_out = moco_forward_momentum(momentum_params, x)
    jax.block_until_ready(query)
    jax.block_until_ready(key_out)

    # Pure-JAX reference mirroring the kernel's bf16 matmul inputs / f32 accumulation.
    x_nhwc = jnp.transpose(x, (0, 2, 3, 1))
    xpad = jnp.pad(x_nhwc, ((0, 0), (1, 1), (1, 1), (0, 0)))
    xpad_bf = xpad.astype(jnp.bfloat16).astype(jnp.float32)
    cw = params["conv_w"].astype(jnp.bfloat16).astype(jnp.float32)     # (9, C, F)
    conv = sum(
        jnp.einsum("bhwc,cf->bhwf",
                   xpad_bf[:, dy:dy + H, dx:dx + W, :], cw[3 * dy + dx])
        for dy in range(3) for dx in range(3)
    )
    feats_ref = jnp.maximum(conv + params["conv_b"], 0.0).mean(axis=(1, 2))
    w1_bf = params["w1"].astype(jnp.bfloat16).astype(jnp.float32)
    w2_bf = params["w2"].astype(jnp.bfloat16).astype(jnp.float32)
    h_ref = jnp.maximum(
        feats_ref.astype(jnp.bfloat16).astype(jnp.float32) @ w1_bf + params["b1"], 0.0)
    q_ref = h_ref.astype(jnp.bfloat16).astype(jnp.float32) @ w2_bf + params["b2"]

    assert query.shape == (B, 128) and key_out.shape == (B, 128)
    assert jnp.allclose(query, q_ref, atol=2e-2, rtol=2e-2), \
        float(jnp.max(jnp.abs(query - q_ref)))
    assert jnp.allclose(key_out, q_ref, atol=2e-2, rtol=2e-2)

    print("KERNEL_OK")
</pallas_src>

<mosaic_0001>
module attributes {stable_mosaic.version = 11 : i64} {
  func.func @kernel(%arg0: i32, %arg1: i32, %arg2: memref<2x256x36xbf16, #tpu.memory_space<vmem>>, %arg3: memref<36x512xbf16, #tpu.memory_space<vmem>>, %arg4: memref<1x512xf32, #tpu.memory_space<vmem>>, %arg5: memref<512x512xbf16, #tpu.memory_space<vmem>>, %arg6: memref<1x512xf32, #tpu.memory_space<vmem>>, %arg7: memref<512x128xbf16, #tpu.memory_space<vmem>>, %arg8: memref<1x128xf32, #tpu.memory_space<vmem>>, %arg9: memref<2x128xf32, #tpu.memory_space<vmem>>, %arg10: memref<2x512xf32, #tpu.memory_space<vmem>>) attributes {dimension_semantics = [#tpu.dimension_semantics<parallel>, #tpu.dimension_semantics<arbitrary>], iteration_bounds = array<i64: 1, 1>, scalar_prefetch = 0 : i64, scratch_operands = 1 : i64, tpu.core_type = #tpu.core_type<tc>, window_params = [{transform_indices = @transform_0, window_bounds = array<i64: 2, 256, 36>}, {pipeline_mode = #tpu.pipeline_mode<synchronous>, transform_indices = @transform_1, window_bounds = array<i64: 36, 512>}, {pipeline_mode = #tpu.pipeline_mode<synchronous>, transform_indices = @transform_2, window_bounds = array<i64: 1, 512>}, {pipeline_mode = #tpu.pipeline_mode<synchronous>, transform_indices = @transform_3, window_bounds = array<i64: 512, 512>}, {pipeline_mode = #tpu.pipeline_mode<synchronous>, transform_indices = @transform_4, window_bounds = array<i64: 1, 512>}, {pipeline_mode = #tpu.pipeline_mode<synchronous>, transform_indices = @transform_5, window_bounds = array<i64: 512, 128>}, {pipeline_mode = #tpu.pipeline_mode<synchronous>, transform_indices = @transform_6, window_bounds = array<i64: 1, 128>}, {transform_indices = @transform_7, window_bounds = array<i64: 2, 128>}]} {
    %c0_i32 = arith.constant 0 : i32
    %0 = arith.cmpi eq, %arg1, %c0_i32 : i32
    %1 = arith.extui %0 : i1 to i32
    %c0_i32_0 = arith.constant 0 : i32
    %2 = arith.cmpi ne, %1, %c0_i32_0 : i32
    scf.if %2 {
      %cst_15 = arith.constant 0.000000e+00 : f32
      %20 = vector.broadcast %cst_15 : f32 to vector<2x512xf32>
      %c0_16 = arith.constant 0 : index
      %c0_17 = arith.constant 0 : index
      %21 = vector.load %arg10[%c0_16, %c0_17] : memref<2x512xf32, #tpu.memory_space<vmem>>, vector<2x512xf32>
      tpu.vector_store %arg10[%c0_16, %c0_17], %20 {strides = array<i32>} : memref<2x512xf32, #tpu.memory_space<vmem>>, vector<2x512xf32>,
    } else {
    }
    %c0 = arith.constant 0 : index
    %c0_1 = arith.constant 0 : index
    %c0_2 = arith.constant 0 : index
    %3 = vector.load %arg2[%c0, %c0_1, %c0_2] : memref<2x256x36xbf16, #tpu.memory_space<vmem>>, vector<2x256x36xbf16>
    %4 = vector.shape_cast %3 : vector<2x256x36xbf16> to vector<512x36xbf16>
    %c0_3 = arith.constant 0 : index
    %c0_4 = arith.constant 0 : index
    %5 = vector.load %arg3[%c0_3, %c0_4] : memref<36x512xbf16, #tpu.memory_space<vmem>>, vector<36x512xbf16>
    %cst = arith.constant dense<0.000000e+00> : vector<512x512xf32>
    %6 = tpu.matmul %4, %5, %cst {dimension_numbers = #tpu.dot_dimension_numbers<[1], [0], [0], [1], [0, 0, 1, 1], [], []>} : vector<512x36xbf16>, vector<36x512xbf16>, vector<512x512xf32> -> vector<512x512xf32>
    %c0_5 = arith.constant 0 : index
    %c0_6 = arith.constant 0 : index
    %7 = vector.load %arg4[%c0_5, %c0_6] : memref<1x512xf32, #tpu.memory_space<vmem>>, vector<1x512xf32>
    %8 = vector.broadcast %7 : vector<1x512xf32> to vector<512x512xf32>
    %9 = arith.addf %6, %8 : vector<512x512xf32>
    %cst_7 = arith.constant 0.000000e+00 : f32
    %10 = vector.broadcast %cst_7 : f32 to vector<512x512xf32>
    %11 = arith.maximumf %9, %10 : vector<512x512xf32>
    %c0_8 = arith.constant 0 : index
    %c0_9 = arith.constant 0 : index
    %12 = vector.load %arg10[%c0_8, %c0_9] : memref<2x512xf32, #tpu.memory_space<vmem>>, vector<2x512xf32>
    %13 = vector.shape_cast %11 : vector<512x512xf32> to vector<2x256x512xf32>
    %cst_10 = arith.constant dense<0.000000e+00> : vector<2x512xf32>
    %14 = vector.multi_reduction <add>, %13, %cst_10 [1] : vector<2x256x512xf32> to vector<2x512xf32>
    %15 = arith.addf %12, %14 : vector<2x512xf32>
    %c0_11 = arith.constant 0 : index
    %c0_12 = arith.constant 0 : index
    %16 = vector.load %arg10[%c0_11, %c0_12] : memref<2x512xf32, #tpu.memory_space<vmem>>, vector<2x512xf32>
    tpu.vector_store %arg10[%c0_11, %c0_12], %15 {strides = array<i32>} : memref<2x512xf32, #tpu.memory_space<vmem>>, vector<2x512xf32>,
    %c0_i32_13 = arith.constant 0 : i32
    %17 = arith.cmpi eq, %arg1, %c0_i32_13 : i32
    %18 = arith.extui %17 : i1 to i32
    %c0_i32_14 = arith.constant 0 : i32
    %19 = arith.cmpi ne, %18, %c0_i32_14 : i32
    scf.if %19 {
      %c0_15 = arith.constant 0 : index
      %c0_16 = arith.constant 0 : index
      %20 = vector.load %arg10[%c0_15, %c0_16] : memref<2x512xf32, #tpu.memory_space<vmem>>, vector<2x512xf32>
      %cst_17 = arith.constant 3.906250e-03 : f32
      %21 = vector.broadcast %cst_17 : f32 to vector<2x512xf32>
      %22 = arith.mulf %20, %21 : vector<2x512xf32>
      %23 = arith.truncf %22 : vector<2x512xf32> to vector<2x512xbf16>
      %c0_18 = arith.constant 0 : index
      %c0_19 = arith.constant 0 : index
      %24 = vector.load %arg5[%c0_18, %c0_19] : memref<512x512xbf16, #tpu.memory_space<vmem>>, vector<512x512xbf16>
      %cst_20 = arith.constant dense<0.000000e+00> : vector<2x512xf32>
      %25 = tpu.matmul %23, %24, %cst_20 {dimension_numbers = #tpu.dot_dimension_numbers<[1], [0], [0], [1], [0, 0, 1, 1], [], []>} : vector<2x512xbf16>, vector<512x512xbf16>, vector<2x512xf32> -> vector<2x512xf32>
      %c0_21 = arith.constant 0 : index
      %c0_22 = arith.constant 0 : index
      %26 = vector.load %arg6[%c0_21, %c0_22] : memref<1x512xf32, #tpu.memory_space<vmem>>, vector<1x512xf32>
      %27 = vector.broadcast %26 : vector<1x512xf32> to vector<2x512xf32>
      %28 = arith.addf %25, %27 : vector<2x512xf32>
      %cst_23 = arith.constant 0.000000e+00 : f32
      %29 = vector.broadcast %cst_23 : f32 to vector<2x512xf32>
      %30 = arith.maximumf %28, %29 : vector<2x512xf32>
      %31 = arith.truncf %30 : vector<2x512xf32> to vector<2x512xbf16>
      %c0_24 = arith.constant 0 : index
      %c0_25 = arith.constant 0 : index
      %32 = vector.load %arg7[%c0_24, %c0_25] : memref<512x128xbf16, #tpu.memory_space<vmem>>, vector<512x128xbf16>
      %cst_26 = arith.constant dense<0.000000e+00> : vector<2x128xf32>
      %33 = tpu.matmul %31, %32, %cst_26 {dimension_numbers = #tpu.dot_dimension_numbers<[1], [0], [0], [1], [0, 0, 1, 1], [], []>} : vector<2x512xbf16>, vector<512x128xbf16>, vector<2x128xf32> -> vector<2x128xf32>
      %c0_27 = arith.constant 0 : index
      %c0_28 = arith.constant 0 : index
      %34 = vector.load %arg8[%c0_27, %c0_28] : memref<1x128xf32, #tpu.memory_space<vmem>>, vector<1x128xf32>
      %35 = vector.broadcast %34 : vector<1x128xf32> to vector<2x128xf32>
      %36 = arith.addf %33, %35 : vector<2x128xf32>
      %c0_29 = arith.constant 0 : index
      %c0_30 = arith.constant 0 : index
      %37 = vector.load %arg9[%c0_29, %c0_30] : memref<2x128xf32, #tpu.memory_space<vmem>>, vector<2x128xf32>
      tpu.vector_store %arg9[%c0_29, %c0_30], %36 {strides = array<i32>} : memref<2x128xf32, #tpu.memory_space<vmem>>, vector<2x128xf32>,
    } else {
    }
    return
  }
  func.func @transform_0(%arg0: i32, %arg1: i32) -> (i32, i32, i32) {
    %c0_i32 = arith.constant 0 : i32
    %c0_i32_0 = arith.constant 0 : i32
    return %arg0, %arg1, %c0_i32 : i32, i32, i32
  }
  func.func @transform_1(%arg0: i32, %arg1: i32) -> (i32, i32) {
    %c0_i32 = arith.constant 0 : i32
    %c0_i32_0 = arith.constant 0 : i32
    %c0_i32_1 = arith.constant 0 : i32
    return %c0_i32, %c0_i32_0 : i32, i32
  }
  func.func @transform_2(%arg0: i32, %arg1: i32) -> (i32, i32) {
    %c0_i32 = arith.constant 0 : i32
    %c0_i32_0 = arith.constant 0 : i32
    %c0_i32_1 = arith.constant 0 : i32
    return %c0_i32, %c0_i32_0 : i32, i32
  }
  func.func @transform_3(%arg0: i32, %arg1: i32) -> (i32, i32) {
    %c0_i32 = arith.constant 0 : i32
    %c0_i32_0 = arith.constant 0 : i32
    %c0_i32_1 = arith.constant 0 : i32
    return %c0_i32, %c0_i32_0 : i32, i32
  }
  func.func @transform_4(%arg0: i32, %arg1: i32) -> (i32, i32) {
    %c0_i32 = arith.constant 0 : i32
    %c0_i32_0 = arith.constant 0 : i32
    %c0_i32_1 = arith.constant 0 : i32
    return %c0_i32, %c0_i32_0 : i32, i32
  }
  func.func @transform_5(%arg0: i32, %arg1: i32) -> (i32, i32) {
    %c0_i32 = arith.constant 0 : i32
    %c0_i32_0 = arith.constant 0 : i32
    %c0_i32_1 = arith.constant 0 : i32
    return %c0_i32, %c0_i32_0 : i32, i32
  }
  func.func @transform_6(%arg0: i32, %arg1: i32) -> (i32, i32) {
    %c0_i32 = arith.constant 0 : i32
    %c0_i32_0 = arith.constant 0 : i32
    %c0_i32_1 = arith.constant 0 : i32
    return %c0_i32, %c0_i32_0 : i32, i32
  }
  func.func @transform_7(%arg0: i32, %arg1: i32) -> (i32, i32) {
    %c0_i32 = arith.constant 0 : i32
    %c0_i32_0 = arith.constant 0 : i32
    return %arg0, %c0_i32 : i32, i32
  }
}

</mosaic_0001>

<llo_original>
// kernel: tpu_custom_call.1
$region0: #{tpu_custom_call.1}
  #allocation0 [shape = 'u32[]', space=smem, size = 0x4, offset = 0x4, fixed_abs, tag = 'smem constant byte address 0x4 - core index']
  #allocation1 [shape = 'u32[144,128]{1,0:T(1,128)}', space=vmem, size = 0x12000, scoped, tag = 'internal scratch']
  #allocation2 [shape = 'f32[2,512]{1,0:T(2,128)}', space=vmem, size = 0x1000, scoped, tag = 'scratch operand']
  %s0 = inlined_call_operand.vmem [shape: bf16[2,256,36], index: 0, kind: input, shape index: {}]
  %s1 = inlined_call_operand.vmem [shape: bf16[36,512], index: 1, kind: input, shape index: {}]
  %s2 = inlined_call_operand.vmem [shape: f32[1,512], index: 2, kind: input, shape index: {}]
  %s3 = inlined_call_operand.hbm [shape: bf16[512,512], index: 3, kind: input, shape index: {}]
  %s4 = inlined_call_operand.vmem [shape: f32[1,512], index: 4, kind: input, shape index: {}]
  %s5 = inlined_call_operand.vmem [shape: bf16[512,128], index: 5, kind: input, shape index: {}]
  %s6 = inlined_call_operand.vmem [shape: f32[1,128], index: 6, kind: input, shape index: {}]
  %s7 = inlined_call_operand.hbm [shape: f32[2,128], index: 7, kind: output, shape index: {}]
  %s8 = sld [smem:[#allocation0]]
  $region50: #{tpu_custom_call.1} parent=0
    _
  %s10 = ssub.s32 1, %s8
  %s11 = scalar_select 0, %s10, %s8
  $region1: #{tpu_custom_call.1} parent=0
    #allocation3 [shape = 'u8[524288]{0}', space=vmem, size = 0x80000, scoped, tag = 'input window, operand 3, single buffered']
    #allocation4 [shape = 's32[1]{0}', space=sflag, size = 0x4, scoped, tag = 'scoped memory for tpu_custom_call.1']
    #allocation5 [shape = 's32[1]{0}', space=sflag, size = 0x4, scoped, tag = 'scoped memory for tpu_custom_call.1']
    #allocation6 [shape = 'u8[1024]{0}', space=vmem, size = 0x400, scoped, tag = 'output window, operand 0, single buffered']
    %12 = vsyncpa [#allocation4], 0
    %13 = vsyncpa [#allocation5], 0
    // Predicated region
    $region2: #{tpu_custom_call.1} parent=1 // pred_check
      _
    $region3: #{tpu_custom_call.1} parent=1 // pred_check_branch
      %15 = sbr.rel (0) target = $region5
    $region4: #{tpu_custom_call.1} parent=1 // pred_region
      _
    $region5: #{tpu_custom_call.1} parent=1 // pred_fallthru
      _
    // Predicated region
    $region6: #{tpu_custom_call.1} parent=1 // pred_check
      _
    $region7: #{tpu_custom_call.1} parent=1 // pred_check_branch
      %17 = sbr.rel (0) target = $region9
    $region8: #{tpu_custom_call.1} parent=1 // pred_region
      _
    $region9: #{tpu_custom_call.1} parent=1 // pred_fallthru
      _
    // Predicated region
    $region10: #{tpu_custom_call.1} parent=1 // pred_check
      _
    $region11: #{tpu_custom_call.1} parent=1 // pred_check_branch
      %19 = sbr.rel (0) target = $region13
    $region12: #{tpu_custom_call.1} parent=1 // pred_region
      _
    $region13: #{tpu_custom_call.1} parent=1 // pred_fallthru
      _
    // Predicated region
    $region14: #{tpu_custom_call.1} parent=1 // pred_check
      _
    $region15: #{tpu_custom_call.1} parent=1 // pred_check_branch
      %21 = sbr.rel (0) target = $region17
    $region16: #{tpu_custom_call.1} parent=1 // pred_region
      %s23 = ssub.s32 16384, 16384
      %24 = vsyncadd [#allocation4], %s23
      %s25 = sshll.u32 [#allocation3], 4
      %s26 = int_to_ptr.vmem [resolvable:$true] %s25
      %31 = dma.hbm_to_vmem [thread:$0]  %s3, 16384, %s26, [#allocation4], 256, 256, 16
    $region17: #{tpu_custom_call.1} parent=1 // pred_fallthru
      _
    // Predicated region
    $region18: #{tpu_custom_call.1} parent=1 // pred_check
      _
    $region19: #{tpu_custom_call.1} parent=1 // pred_check_branch
      %33 = sbr.rel (0) target = $region21
    $region20: #{tpu_custom_call.1} parent=1 // pred_region
      _
    $region21: #{tpu_custom_call.1} parent=1 // pred_fallthru
      _
    // Predicated region
    $region22: #{tpu_custom_call.1} parent=1 // pred_check
      _
    $region23: #{tpu_custom_call.1} parent=1 // pred_check_branch
      %35 = sbr.rel (0) target = $region25
    $region24: #{tpu_custom_call.1} parent=1 // pred_region
      _
    $region25: #{tpu_custom_call.1} parent=1 // pred_fallthru
      _
    // Predicated region
    $region26: #{tpu_custom_call.1} parent=1 // pred_check
      _
    $region27: #{tpu_custom_call.1} parent=1 // pred_check_branch
      %37 = sbr.rel (0) target = $region29
    $region28: #{tpu_custom_call.1} parent=1 // pred_region
      _
    $region29: #{tpu_custom_call.1} parent=1 // pred_fallthru
      _
    // Predicated region
    $region30: #{tpu_custom_call.1} parent=1 // pred_check
      _
    $region31: #{tpu_custom_call.1} parent=1 // pred_check_branch
      %39 = sbr.rel (0) target = $region33
    $region32: #{tpu_custom_call.1} parent=1 // pred_region
      %40 = dma.done [#allocation4], 16384
    $region33: #{tpu_custom_call.1} parent=1 // pred_fallthru
      _
    %p42 = scmp.eq.s32.totalorder 0, 0
    // Predicated region
    $region34: #{tpu_custom_call.1} parent=1 // pred_check
      %p43 = pneg %p42
    $region35: #{tpu_custom_call.1} parent=1 // pred_check_branch
      %45 = sbr.rel (%p43) target = $region37
    $region36: #{tpu_custom_call.1} parent=1 // pred_region
      %46 = vst [vmem:[#allocation2] sm:$0xff] 0.0
    $region37: #{tpu_custom_call.1} parent=1 // pred_fallthru
      _
    %v47 = vld [vmem:[%s0] sm:$0xf]
    %v48 = vld [vmem:[%s0 + $0x4] sm:$0xf]
    %v49 = vld [vmem:[%s0 + $0x8] sm:$0xf]
    %v50 = vld [vmem:[%s0 + $0xc] sm:$0xf]
    %v51 = vld [vmem:[%s0 + $0x10] sm:$0xf]
    %v52 = vld [vmem:[%s0 + $0x14] sm:$0xf]
    %v53 = vld [vmem:[%s0 + $0x18] sm:$0xf]
    %v54 = vld [vmem:[%s0 + $0x1c] sm:$0xf]
    %v55 = vld [vmem:[%s0 + $0x20] sm:$0xf]
    %v56 = vld [vmem:[%s0 + $0x24] sm:$0xf]
    %v57 = vld [vmem:[%s0 + $0x28] sm:$0xf]
    %v58 = vld [vmem:[%s0 + $0x2c] sm:$0xf]
    %v59 = vld [vmem:[%s0 + $0x30] sm:$0xf]
    %v60 = vld [vmem:[%s0 + $0x34] sm:$0xf]
    %v61 = vld [vmem:[%s0 + $0x38] sm:$0xf]
    %v62 = vld [vmem:[%s0 + $0x3c] sm:$0xf]
    %v63 = vld [vmem:[%s0 + $0x40] sm:$0xf]
    %v64 = vld [vmem:[%s0 + $0x44] sm:$0xf]
    %v65 = vld [vmem:[%s0 + $0x48] sm:$0xf]
    %v66 = vld [vmem:[%s0 + $0x4c] sm:$0xf]
    %v67 = vld [vmem:[%s0 + $0x50] sm:$0xf]
    %v68 = vld [vmem:[%s0 + $0x54] sm:$0xf]
    %v69 = vld [vmem:[%s0 + $0x58] sm:$0xf]
    %v70 = vld [vmem:[%s0 + $0x5c] sm:$0xf]
    %v71 = vld [vmem:[%s0 + $0x60] sm:$0xf]
    %v72 = vld [vmem:[%s0 + $0x64] sm:$0xf]
    %v73 = vld [vmem:[%s0 + $0x68] sm:$0xf]
    %v74 = vld [vmem:[%s0 + $0x6c] sm:$0xf]
    %v75 = vld [vmem:[%s0 + $0x70] sm:$0xf]
    %v76 = vld [vmem:[%s0 + $0x74] sm:$0xf]
    %v77 = vld [vmem:[%s0 + $0x78] sm:$0xf]
    %v78 = vld [vmem:[%s0 + $0x7c] sm:$0xf]
    %v79 = vld [vmem:[%s0 + $0x80] sm:$0xf]
    %v80 = vld [vmem:[%s0 + $0x84] sm:$0xf]
    %v81 = vld [vmem:[%s0 + $0x88] sm:$0xf]
    %v82 = vld [vmem:[%s0 + $0x8c] sm:$0xf]
    %v83 = vld [vmem:[%s0 + $0x90] sm:$0xf]
    %v84 = vld [vmem:[%s0 + $0x94] sm:$0xf]
    %v85 = vld [vmem:[%s0 + $0x98] sm:$0xf]
    %v86 = vld [vmem:[%s0 + $0x9c] sm:$0xf]
    %v87 = vld [vmem:[%s0 + $0xa0] sm:$0xf]
    %v88 = vld [vmem:[%s0 + $0xa4] sm:$0xf]
    %v89 = vld [vmem:[%s0 + $0xa8] sm:$0xf]
    %v90 = vld [vmem:[%s0 + $0xac] sm:$0xf]
    %v91 = vld [vmem:[%s0 + $0xb0] sm:$0xf]
    %v92 = vld [vmem:[%s0 + $0xb4] sm:$0xf]
    %v93 = vld [vmem:[%s0 + $0xb8] sm:$0xf]
    %v94 = vld [vmem:[%s0 + $0xbc] sm:$0xf]
    %v95 = vld [vmem:[%s0 + $0xc0] sm:$0xf]
    %v96 = vld [vmem:[%s0 + $0xc4] sm:$0xf]
    %v97 = vld [vmem:[%s0 + $0xc8] sm:$0xf]
    %v98 = vld [vmem:[%s0 + $0xcc] sm:$0xf]
    %v99 = vld [vmem:[%s0 + $0xd0] sm:$0xf]
    %v100 = vld [vmem:[%s0 + $0xd4] sm:$0xf]
    %v101 = vld [vmem:[%s0 + $0xd8] sm:$0xf]
    %v102 = vld [vmem:[%s0 + $0xdc] sm:$0xf]
    %v103 = vld [vmem:[%s0 + $0xe0] sm:$0xf]
    %v104 = vld [vmem:[%s0 + $0xe4] sm:$0xf]
    %v105 = vld [vmem:[%s0 + $0xe8] sm:$0xf]
    %v106 = vld [vmem:[%s0 + $0xec] sm:$0xf]
    %v107 = vld [vmem:[%s0 + $0xf0] sm:$0xf]
    %v108 = vld [vmem:[%s0 + $0xf4] sm:$0xf]
    %v109 = vld [vmem:[%s0 + $0xf8] sm:$0xf]
    %v110 = vld [vmem:[%s0 + $0xfc] sm:$0xf]
    %v111 = vld [vmem:[%s1] sm:$0xff]
    %v112 = vld [vmem:[%s1 + $0x8] sm:$0xff]
    %v113 = vld [vmem:[%s1 + $0x10] sm:$0xff]
    %v114 = vld [vmem:[%s1 + $0x18] sm:$0xff]
    %v115 = vld [vmem:[%s1 + $0x20] sm:$0xff]
    %v116 = vld [vmem:[%s1 + $0x28] sm:$0xff]
    %v117 = vld [vmem:[%s1 + $0x30] sm:$0xff]
    %v118 = vld [vmem:[%s1 + $0x38] sm:$0xff]
    %v119 = vld [vmem:[%s1 + $0x40] sm:$0x33]
    %v120 = vld [vmem:[%s1 + $0x48] sm:$0x33]
    %v121 = vld [vmem:[%s2] sm:$0xf]
    %v123 = vlaneseq
    %v124 = vshrl.u32 %v123, 7
    %v125 = vsub.s32 0, %v124
    %v126 = vrot.slane %v121, %v125
    %v127 = vlaneseq
    %v128 = vshrl.u32 %v127, 7
    %v129 = vsub.s32 1, %v128
    %v130 = vrot.slane %v121, %v129
    %v131 = vlaneseq
    %v132 = vshrl.u32 %v131, 7
    %v133 = vsub.s32 2, %v132
    %v134 = vrot.slane %v121, %v133
    %v135 = vlaneseq
    %v136 = vshrl.u32 %v135, 7
    %v137 = vsub.s32 3, %v136
    %v138 = vrot.slane %v121, %v137
    %v207 = vunpack.c.l.b16 %v47
    %v208 = vunpack.c.l.b16 %v48
    %v209 = vunpack.c.l.b16 %v49
    %v210 = vunpack.c.l.b16 %v50
    %v211 = vunpack.c.l.b16 %v51
    %v212 = vunpack.c.l.b16 %v52
    %v213 = vunpack.c.l.b16 %v53
    %v214 = vunpack.c.l.b16 %v54
    %v215 = vunpack.c.l.b16 %v55
    %v216 = vunpack.c.l.b16 %v56
    %v217 = vunpack.c.l.b16 %v57
    %v218 = vunpack.c.l.b16 %v58
    %v219 = vunpack.c.l.b16 %v59
    %v220 = vunpack.c.l.b16 %v60
    %v221 = vunpack.c.l.b16 %v61
    %v222 = vunpack.c.l.b16 %v62
    %v223 = vunpack.c.l.b16 %v63
    %v224 = vunpack.c.l.b16 %v64
    %v225 = vunpack.c.l.b16 %v65
    %v226 = vunpack.c.l.b16 %v66
    %v227 = vunpack.c.l.b16 %v67
    %v228 = vunpack.c.l.b16 %v68
    %v229 = vunpack.c.l.b16 %v69
    %v230 = vunpack.c.l.b16 %v70
    %v231 = vunpack.c.l.b16 %v71
    %v232 = vunpack.c.l.b16 %v72
    %v233 = vunpack.c.l.b16 %v73
    %v234 = vunpack.c.l.b16 %v74
    %v235 = vunpack.c.l.b16 %v75
    %v236 = vunpack.c.l.b16 %v76
    %v237 = vunpack.c.l.b16 %v77
    %v238 = vunpack.c.l.b16 %v78
    %v239 = vunpack.c.l.b16 %v79
    %v240 = vunpack.c.l.b16 %v80
    %v241 = vunpack.c.l.b16 %v81
    %v242 = vunpack.c.l.b16 %v82
    %v243 = vunpack.c.l.b16 %v83
    %v244 = vunpack.c.l.b16 %v84
    %v245 = vunpack.c.l.b16 %v85
    %v246 = vunpack.c.l.b16 %v86
    %v247 = vunpack.c.l.b16 %v87
    %v248 = vunpack.c.l.b16 %v88
    %v249 = vunpack.c.l.b16 %v89
    %v250 = vunpack.c.l.b16 %v90
    %v251 = vunpack.c.l.b16 %v91
    %v252 = vunpack.c.l.b16 %v92
    %v253 = vunpack.c.l.b16 %v93
    %v254 = vunpack.c.l.b16 %v94
    %v255 = vunpack.c.l.b16 %v95
    %v256 = vunpack.c.l.b16 %v96
    %v257 = vunpack.c.l.b16 %v97
    %v258 = vunpack.c.l.b16 %v98
    %v259 = vunpack.c.l.b16 %v99
    %v260 = vunpack.c.l.b16 %v100
    %v261 = vunpack.c.l.b16 %v101
    %v262 = vunpack.c.l.b16 %v102
    %v263 = vunpack.c.l.b16 %v103
    %v264 = vunpack.c.l.b16 %v104
    %v265 = vunpack.c.l.b16 %v105
    %v266 = vunpack.c.l.b16 %v106
    %v267 = vunpack.c.l.b16 %v107
    %v268 = vunpack.c.l.b16 %v108
    %v269 = vunpack.c.l.b16 %v109
    %v270 = vunpack.c.l.b16 %v110
    %v271 = vpack.c.b16 %v208, %v207
    %v272 = vpack.c.b16 %v210, %v209
    %v273 = vpack.c.b16 %v212, %v211
    %v274 = vpack.c.b16 %v214, %v213
    %v275 = vpack.c.b16 %v216, %v215
    %v276 = vpack.c.b16 %v218, %v217
    %v277 = vpack.c.b16 %v220, %v219
    %v278 = vpack.c.b16 %v222, %v221
    %v279 = vpack.c.b16 %v224, %v223
    %v280 = vpack.c.b16 %v226, %v225
    %v281 = vpack.c.b16 %v228, %v227
    %v282 = vpack.c.b16 %v230, %v229
    %v283 = vpack.c.b16 %v232, %v231
    %v284 = vpack.c.b16 %v234, %v233
    %v285 = vpack.c.b16 %v236, %v235
    %v286 = vpack.c.b16 %v238, %v237
    %v287 = vpack.c.b16 %v240, %v239
    %v288 = vpack.c.b16 %v242, %v241
    %v289 = vpack.c.b16 %v244, %v243
    %v290 = vpack.c.b16 %v246, %v245
    %v291 = vpack.c.b16 %v248, %v247
    %v292 = vpack.c.b16 %v250, %v249
    %v293 = vpack.c.b16 %v252, %v251
    %v294 = vpack.c.b16 %v254, %v253
    %v295 = vpack.c.b16 %v256, %v255
    %v296 = vpack.c.b16 %v258, %v257
    %v297 = vpack.c.b16 %v260, %v259
    %v298 = vpack.c.b16 %v262, %v261
    %v299 = vpack.c.b16 %v264, %v263
    %v300 = vpack.c.b16 %v266, %v265
    %v301 = vpack.c.b16 %v268, %v267
    %v302 = vpack.c.b16 %v270, %v269
    %v313 = vunpack.c.l.b16 %v111
    %v314 = vunpack.c.h.b16 %v111
    %v315 = vunpack.c.l.b16 %v112
    %v316 = vunpack.c.h.b16 %v112
    %v317 = vunpack.c.l.b16 %v113
    %v318 = vunpack.c.h.b16 %v113
    %v319 = vunpack.c.l.b16 %v114
    %v320 = vunpack.c.h.b16 %v114
    %v321 = vunpack.c.l.b16 %v115
    %v322 = vunpack.c.h.b16 %v115
    %v323 = vunpack.c.l.b16 %v116
    %v324 = vunpack.c.h.b16 %v116
    %v325 = vunpack.c.l.b16 %v117
    %v326 = vunpack.c.h.b16 %v117
    %v327 = vunpack.c.l.b16 %v118
    %v328 = vunpack.c.h.b16 %v118
    %v329 = vunpack.c.l.b16 %v119
    %v330 = vunpack.c.h.b16 %v119
    %v331 = vunpack.c.l.b16 %v120
    %v332 = vunpack.c.h.b16 %v120
    %v333 = vpack.c.b16 %v317, %v313
    %v334 = vpack.c.b16 %v318, %v314
    %v335 = vpack.c.b16 %v319, %v315
    %v336 = vpack.c.b16 %v320, %v316
    %v337 = vpack.c.b16 %v325, %v321
    %v338 = vpack.c.b16 %v326, %v322
    %v339 = vpack.c.b16 %v327, %v323
    %v340 = vpack.c.b16 %v328, %v324
    %v341 = vpack.c.b16 %v329, %v329
    %v342 = vpack.c.b16 %v330, %v330
    %v343 = vpack.c.b16 %v331, %v331
    %v344 = vpack.c.b16 %v332, %v332
    %vm353 = vcmask 293888
    %v355 = vsel %vm353, %v271, 0
    %v358 = vsel %vm353, %v272, 0
    %v361 = vsel %vm353, %v273, 0
    %v364 = vsel %vm353, %v274, 0
    %v367 = vsel %vm353, %v275, 0
    %v370 = vsel %vm353, %v276, 0
    %v373 = vsel %vm353, %v277, 0
    %v376 = vsel %vm353, %v278, 0
    %v379 = vsel %vm353, %v279, 0
    %v382 = vsel %vm353, %v280, 0
    %v385 = vsel %vm353, %v281, 0
    %v388 = vsel %vm353, %v282, 0
    %v391 = vsel %vm353, %v283, 0
    %v394 = vsel %vm353, %v284, 0
    %v397 = vsel %vm353, %v285, 0
    %v400 = vsel %vm353, %v286, 0
    %v403 = vsel %vm353, %v287, 0
    %v406 = vsel %vm353, %v288, 0
    %v409 = vsel %vm353, %v289, 0
    %v412 = vsel %vm353, %v290, 0
    %v415 = vsel %vm353, %v291, 0
    %v418 = vsel %vm353, %v292, 0
    %v421 = vsel %vm353, %v293, 0
    %v424 = vsel %vm353, %v294, 0
    %v427 = vsel %vm353, %v295, 0
    %v430 = vsel %vm353, %v296, 0
    %v433 = vsel %vm353, %v297, 0
    %v436 = vsel %vm353, %v298, 0
    %v439 = vsel %vm353, %v299, 0
    %v442 = vsel %vm353, %v300, 0
    %v445 = vsel %vm353, %v301, 0
    %v448 = vsel %vm353, %v302, 0
    %vm450 = vcmask 1041408
    %v452 = vsel %vm450, %v341, 0
    %v455 = vsel %vm450, %v342, 0
    %v458 = vsel %vm450, %v343, 0
    %v461 = vsel %vm450, %v344, 0
    %463 = vmatprep.subr.bf16.mxu0 %v334
    %464 = vmatpush1.bf16.msra.mxu0 %v333
    %465 = vmatprep.subr.bf16.mxu0 %v338
    %466 = vmatpush1.bf16.msra.mxu0 %v337
    %467 = vmatprep.subr.bf16.mxu0 %v455
    %468 = vmatpush1.bf16.msra.mxu0 %v452
    %469 = vmatprep.subr.bf16.mxu0 0
    %470 = vmatpush1.bf16.msra.mxu0 0
    %471 = vmatprep.subr.bf16.mxu0 0
    %472 = vmatpush1.bf16.msra.mxu0 0
    %473 = vmatprep.subr.bf16.mxu0 0
    %474 = vmatpush1.bf16.msra.mxu0 0
    %475 = vmatprep.subr.bf16.mxu0 0
    %476 = vmatpush1.bf16.msra.mxu0 0
    %477 = vmatprep.subr.bf16.mxu0 0
    %478 = vmatpush1.bf16.msra.mxu0 0
    %479 = vmatprep.subr.bf16.mxu0 0
    %480 = vmatpush1.bf16.msra.mxu0 0
    %481 = vmatprep.subr.bf16.mxu0 0
    %482 = vmatpush1.bf16.msra.mxu0 0
    %483 = vmatprep.subr.bf16.mxu0 0
    %484 = vmatpush1.bf16.msra.mxu0 0
    %485 = vmatprep.subr.bf16.mxu0 0
    %486 = vmatpush1.bf16.msra.mxu0 0
    %487 = vmatprep.subr.bf16.mxu0 0
    %488 = vmatpush1.bf16.msra.mxu0 0
    %489 = vmatprep.subr.bf16.mxu0 0
    %490 = vmatpush1.bf16.msra.mxu0 0
    %491 = vmatprep.subr.bf16.mxu0 0
    %492 = vmatpush1.bf16.msra.mxu0 0
    %493 = vmatprep.subr.bf16.mxu0 0
    %494 = vmatpush1.bf16.msra.mxu0 0
    %495 = vmatprep.mubr.bf16.mxu0 0
    %496 = vmatmul.mubr.bf16.gmra.mrb[0].mxu0 %v355
    %v497 = vpop.f32.mrb[0].mxu0
    %v498 = vadd.f32 %v126, %v497
    %v499 = vpop.f32.mrb[0].mxu0
    %v500 = vadd.f32 %v130, %v499
    %v501 = vpop.f32.mrb[0].mxu0
    %v502 = vadd.f32 %v126, %v501
    %v503 = vpop.f32.mrb[0].mxu0
    %v504 = vadd.f32 %v130, %v503
    %505 = vmatprep.mubr.bf16.mxu0 0
    %506 = vmatmul.mubr.bf16.gmra.mrb[0].mxu0 %v358
    %v507 = vpop.f32.mrb[0].mxu0
    %v508 = vadd.f32 %v126, %v507
    %v509 = vpop.f32.mrb[0].mxu0
    %v510 = vadd.f32 %v130, %v509
    %v511 = vpop.f32.mrb[0].mxu0
    %v512 = vadd.f32 %v126, %v511
    %v513 = vpop.f32.mrb[0].mxu0
    %v514 = vadd.f32 %v130, %v513
    %515 = vmatprep.mubr.bf16.mxu0 0
    %516 = vmatmul.mubr.bf16.gmra.mrb[0].mxu0 %v361
    %v517 = vpop.f32.mrb[0].mxu0
    %v518 = vadd.f32 %v126, %v517
    %v519 = vpop.f32.mrb[0].mxu0
    %v520 = vadd.f32 %v130, %v519
    %v521 = vpop.f32.mrb[0].mxu0
    %v522 = vadd.f32 %v126, %v521
    %v523 = vpop.f32.mrb[0].mxu0
    %v524 = vadd.f32 %v130, %v523
    %525 = vmatprep.mubr.bf16.mxu0 0
    %526 = vmatmul.mubr.bf16.gmra.mrb[0].mxu0 %v364
    %v527 = vpop.f32.mrb[0].mxu0
    %v528 = vadd.f32 %v126, %v527
    %v529 = vpop.f32.mrb[0].mxu0
    %v530 = vadd.f32 %v130, %v529
    %v531 = vpop.f32.mrb[0].mxu0
    %v532 = vadd.f32 %v126, %v531
    %v533 = vpop.f32.mrb[0].mxu0
    %v534 = vadd.f32 %v130, %v533
    %535 = vmatprep.mubr.bf16.mxu0 0
    %536 = vmatmul.mubr.bf16.gmra.mrb[0].mxu0 %v367
    %v537 = vpop.f32.mrb[0].mxu0
    %v538 = vadd.f32 %v126, %v537
    %v539 = vpop.f32.mrb[0].mxu0
    %v540 = vadd.f32 %v130, %v539
    %v541 = vpop.f32.mrb[0].mxu0
    %v542 = vadd.f32 %v126, %v541
    %v543 = vpop.f32.mrb[0].mxu0
    %v544 = vadd.f32 %v130, %v543
    %545 = vmatprep.mubr.bf16.mxu0 0
    %546 = vmatmul.mubr.bf16.gmra.mrb[0].mxu0 %v370
    %v547 = vpop.f32.mrb[0].mxu0
    %v548 = vadd.f32 %v126, %v547
    %v549 = vpop.f32.mrb[0].mxu0
    %v550 = vadd.f32 %v130, %v549
    %v551 = vpop.f32.mrb[0].mxu0
    %v552 = vadd.f32 %v126, %v551
    %v553 = vpop.f32.mrb[0].mxu0
    %v554 = vadd.f32 %v130, %v553
    %555 = vmatprep.mubr.bf16.mxu0 0
    %556 = vmatmul.mubr.bf16.gmra.mrb[0].mxu0 %v373
    %v557 = vpop.f32.mrb[0].mxu0
    %v558 = vadd.f32 %v126, %v557
    %v559 = vpop.f32.mrb[0].mxu0
    %v560 = vadd.f32 %v130, %v559
    %v561 = vpop.f32.mrb[0].mxu0
    %v562 = vadd.f32 %v126, %v561
    %v563 = vpop.f32.mrb[0].mxu0
    %v564 = vadd.f32 %v130, %v563
    %565 = vmatprep.mubr.bf16.mxu0 0
    %566 = vmatmul.mubr.bf16.gmra.mrb[0].mxu0 %v376
    %v567 = vpop.f32.mrb[0].mxu0
    %v568 = vadd.f32 %v126, %v567
    %v569 = vpop.f32.mrb[0].mxu0
    %v570 = vadd.f32 %v130, %v569
    %v571 = vpop.f32.mrb[0].mxu0
    %v572 = vadd.f32 %v126, %v571
    %v573 = vpop.f32.mrb[0].mxu0
    %v574 = vadd.f32 %v130, %v573
    %575 = vmatprep.mubr.bf16.mxu0 0
    %576 = vmatmul.mubr.bf16.gmra.mrb[0].mxu0 %v379
    %v577 = vpop.f32.mrb[0].mxu0
    %v578 = vadd.f32 %v126, %v577
    %v579 = vpop.f32.mrb[0].mxu0
    %v580 = vadd.f32 %v130, %v579
    %v581 = vpop.f32.mrb[0].mxu0
    %v582 = vadd.f32 %v126, %v581
    %v583 = vpop.f32.mrb[0].mxu0
    %v584 = vadd.f32 %v130, %v583
    %585 = vmatprep.mubr.bf16.mxu0 0
    %586 = vmatmul.mubr.bf16.gmra.mrb[0].mxu0 %v382
    %v587 = vpop.f32.mrb[0].mxu0
    %v588 = vadd.f32 %v126, %v587
    %v589 = vpop.f32.mrb[0].mxu0
    %v590 = vadd.f32 %v130, %v589
    %v591 = vpop.f32.mrb[0].mxu0
    %v592 = vadd.f32 %v126, %v591
    %v593 = vpop.f32.mrb[0].mxu0
    %v594 = vadd.f32 %v130, %v593
    %595 = vmatprep.mubr.bf16.mxu0 0
    %596 = vmatmul.mubr.bf16.gmra.mrb[0].mxu0 %v385
    %v597 = vpop.f32.mrb[0].mxu0
    %v598 = vadd.f32 %v126, %v597
    %v599 = vpop.f32.mrb[0].mxu0
    %v600 = vadd.f32 %v130, %v599
    %v601 = vpop.f32.mrb[0].mxu0
    %v602 = vadd.f32 %v126, %v601
    %v603 = vpop.f32.mrb[0].mxu0
    %v604 = vadd.f32 %v130, %v603
    %605 = vmatprep.mubr.bf16.mxu0 0
    %606 = vmatmul.mubr.bf16.gmra.mrb[0].mxu0 %v388
    %v607 = vpop.f32.mrb[0].mxu0
    %v608 = vadd.f32 %v126, %v607
    %v609 = vpop.f32.mrb[0].mxu0
    %v610 = vadd.f32 %v130, %v609
    %v611 = vpop.f32.mrb[0].mxu0
    %v612 = vadd.f32 %v126, %v611
    %v613 = vpop.f32.mrb[0].mxu0
    %v614 = vadd.f32 %v130, %v613
    %615 = vmatprep.mubr.bf16.mxu0 0
    %616 = vmatmul.mubr.bf16.gmra.mrb[0].mxu0 %v391
    %v617 = vpop.f32.mrb[0].mxu0
    %v618 = vadd.f32 %v126, %v617
    %v619 = vpop.f32.mrb[0].mxu0
    %v620 = vadd.f32 %v130, %v619
    %v621 = vpop.f32.mrb[0].mxu0
    %v622 = vadd.f32 %v126, %v621
    %v623 = vpop.f32.mrb[0].mxu0
    %v624 = vadd.f32 %v130, %v623
    %625 = vmatprep.mubr.bf16.mxu0 0
    %626 = vmatmul.mubr.bf16.gmra.mrb[0].mxu0 %v394
    %v627 = vpop.f32.mrb[0].mxu0
    %v628 = vadd.f32 %v126, %v627
    %v629 = vpop.f32.mrb[0].mxu0
    %v630 = vadd.f32 %v130, %v629
    %v631 = vpop.f32.mrb[0].mxu0
    %v632 = vadd.f32 %v126, %v631
    %v633 = vpop.f32.mrb[0].mxu0
    %v634 = vadd.f32 %v130, %v633
    %635 = vmatprep.mubr.bf16.mxu0 0
    %636 = vmatmul.mubr.bf16.gmra.mrb[0].mxu0 %v397
    %v637 = vpop.f32.mrb[0].mxu0
    %v638 = vadd.f32 %v126, %v637
    %v639 = vpop.f32.mrb[0].mxu0
    %v640 = vadd.f32 %v130, %v639
    %v641 = vpop.f32.mrb[0].mxu0
    %v642 = vadd.f32 %v126, %v641
    %v643 = vpop.f32.mrb[0].mxu0
    %v644 = vadd.f32 %v130, %v643
    %645 = vmatprep.mubr.bf16.mxu0 0
    %646 = vmatmul.mubr.bf16.gmra.mrb[0].mxu0 %v400
    %v647 = vpop.f32.mrb[0].mxu0
    %v648 = vadd.f32 %v126, %v647
    %v649 = vpop.f32.mrb[0].mxu0
    %v650 = vadd.f32 %v130, %v649
    %v651 = vpop.f32.mrb[0].mxu0
    %v652 = vadd.f32 %v126, %v651
    %v653 = vpop.f32.mrb[0].mxu0
    %v654 = vadd.f32 %v130, %v653
    %655 = vmatprep.mubr.bf16.mxu0 0
    %656 = vmatmul.mubr.bf16.gmra.mrb[0].mxu0 %v403
    %v657 = vpop.f32.mrb[0].mxu0
    %v658 = vadd.f32 %v126, %v657
    %v659 = vpop.f32.mrb[0].mxu0
    %v660 = vadd.f32 %v130, %v659
    %v661 = vpop.f32.mrb[0].mxu0
    %v662 = vadd.f32 %v126, %v661
    %v663 = vpop.f32.mrb[0].mxu0
    %v664 = vadd.f32 %v130, %v663
    %665 = vmatprep.mubr.bf16.mxu0 0
    %666 = vmatmul.mubr.bf16.gmra.mrb[0].mxu0 %v406
    %v667 = vpop.f32.mrb[0].mxu0
    %v668 = vadd.f32 %v126, %v667
    %v669 = vpop.f32.mrb[0].mxu0
    %v670 = vadd.f32 %v130, %v669
    %v671 = vpop.f32.mrb[0].mxu0
    %v672 = vadd.f32 %v126, %v671
    %v673 = vpop.f32.mrb[0].mxu0
    %v674 = vadd.f32 %v130, %v673
    %675 = vmatprep.mubr.bf16.mxu0 0
    %676 = vmatmul.mubr.bf16.gmra.mrb[0].mxu0 %v409
    %v677 = vpop.f32.mrb[0].mxu0
    %v678 = vadd.f32 %v126, %v677
    %v679 = vpop.f32.mrb[0].mxu0
    %v680 = vadd.f32 %v130, %v679
    %v681 = vpop.f32.mrb[0].mxu0
    %v682 = vadd.f32 %v126, %v681
    %v683 = vpop.f32.mrb[0].mxu0
    %v684 = vadd.f32 %v130, %v683
    %685 = vmatprep.mubr.bf16.mxu0 0
    %686 = vmatmul.mubr.bf16.gmra.mrb[0].mxu0 %v412
    %v687 = vpop.f32.mrb[0].mxu0
    %v688 = vadd.f32 %v126, %v687
    %v689 = vpop.f32.mrb[0].mxu0
    %v690 = vadd.f32 %v130, %v689
    %v691 = vpop.f32.mrb[0].mxu0
    %v692 = vadd.f32 %v126, %v691
    %v693 = vpop.f32.mrb[0].mxu0
    %v694 = vadd.f32 %v130, %v693
    %695 = vmatprep.mubr.bf16.mxu0 0
    %696 = vmatmul.mubr.bf16.gmra.mrb[0].mxu0 %v415
    %v697 = vpop.f32.mrb[0].mxu0
    %v698 = vadd.f32 %v126, %v697
    %v699 = vpop.f32.mrb[0].mxu0
    %v700 = vadd.f32 %v130, %v699
    %v701 = vpop.f32.mrb[0].mxu0
    %v702 = vadd.f32 %v126, %v701
    %v703 = vpop.f32.mrb[0].mxu0
    %v704 = vadd.f32 %v130, %v703
    %705 = vmatprep.mubr.bf16.mxu0 0
    %706 = vmatmul.mubr.bf16.gmra.mrb[0].mxu0 %v418
    %v707 = vpop.f32.mrb[0].mxu0
    %v708 = vadd.f32 %v126, %v707
    %v709 = vpop.f32.mrb[0].mxu0
    %v710 = vadd.f32 %v130, %v709
    %v711 = vpop.f32.mrb[0].mxu0
    %v712 = vadd.f32 %v126, %v711
    %v713 = vpop.f32.mrb[0].mxu0
    %v714 = vadd.f32 %v130, %v713
    %715 = vmatprep.mubr.bf16.mxu0 0
    %716 = vmatmul.mubr.bf16.gmra.mrb[0].mxu0 %v421
    %v717 = vpop.f32.mrb[0].mxu0
    %v718 = vadd.f32 %v126, %v717
    %v719 = vpop.f32.mrb[0].mxu0
    %v720 = vadd.f32 %v130, %v719
    %v721 = vpop.f32.mrb[0].mxu0
    %v722 = vadd.f32 %v126, %v721
    %v723 = vpop.f32.mrb[0].mxu0
    %v724 = vadd.f32 %v130, %v723
    %725 = vmatprep.mubr.bf16.mxu0 0
    %726 = vmatmul.mubr.bf16.gmra.mrb[0].mxu0 %v424
    %v727 = vpop.f32.mrb[0].mxu0
    %v728 = vadd.f32 %v126, %v727
    %v729 = vpop.f32.mrb[0].mxu0
    %v730 = vadd.f32 %v130, %v729
    %v731 = vpop.f32.mrb[0].mxu0
    %v732 = vadd.f32 %v126, %v731
    %v733 = vpop.f32.mrb[0].mxu0
    %v734 = vadd.f32 %v130, %v733
    %735 = vmatprep.mubr.bf16.mxu0 0
    %736 = vmatmul.mubr.bf16.gmra.mrb[0].mxu0 %v427
    %v737 = vpop.f32.mrb[0].mxu0
    %v738 = vadd.f32 %v126, %v737
    %v739 = vpop.f32.mrb[0].mxu0
    %v740 = vadd.f32 %v130, %v739
    %v741 = vpop.f32.mrb[0].mxu0
    %v742 = vadd.f32 %v126, %v741
    %v743 = vpop.f32.mrb[0].mxu0
    %v744 = vadd.f32 %v130, %v743
    %745 = vmatprep.mubr.bf16.mxu0 0
    %746 = vmatmul.mubr.bf16.gmra.mrb[0].mxu0 %v430
    %v747 = vpop.f32.mrb[0].mxu0
    %v748 = vadd.f32 %v126, %v747
    %v749 = vpop.f32.mrb[0].mxu0
    %v750 = vadd.f32 %v130, %v749
    %v751 = vpop.f32.mrb[0].mxu0
    %v752 = vadd.f32 %v126, %v751
    %v753 = vpop.f32.mrb[0].mxu0
    %v754 = vadd.f32 %v130, %v753
    %755 = vmatprep.mubr.bf16.mxu0 0
    %756 = vmatmul.mubr.bf16.gmra.mrb[0].mxu0 %v433
    %v757 = vpop.f32.mrb[0].mxu0
    %v758 = vadd.f32 %v126, %v757
    %v759 = vpop.f32.mrb[0].mxu0
    %v760 = vadd.f32 %v130, %v759
    %v761 = vpop.f32.mrb[0].mxu0
    %v762 = vadd.f32 %v126, %v761
    %v763 = vpop.f32.mrb[0].mxu0
    %v764 = vadd.f32 %v130, %v763
    %765 = vmatprep.mubr.bf16.mxu0 0
    %766 = vmatmul.mubr.bf16.gmra.mrb[0].mxu0 %v436
    %v767 = vpop.f32.mrb[0].mxu0
    %v768 = vadd.f32 %v126, %v767
    %v769 = vpop.f32.mrb[0].mxu0
    %v770 = vadd.f32 %v130, %v769
    %v771 = vpop.f32.mrb[0].mxu0
    %v772 = vadd.f32 %v126, %v771
    %v773 = vpop.f32.mrb[0].mxu0
    %v774 = vadd.f32 %v130, %v773
    %775 = vmatprep.mubr.bf16.mxu0 0
    %776 = vmatmul.mubr.bf16.gmra.mrb[0].mxu0 %v439
    %v777 = vpop.f32.mrb[0].mxu0
    %v778 = vadd.f32 %v126, %v777
    %v779 = vpop.f32.mrb[0].mxu0
    %v780 = vadd.f32 %v130, %v779
    %v781 = vpop.f32.mrb[0].mxu0
    %v782 = vadd.f32 %v126, %v781
    %v783 = vpop.f32.mrb[0].mxu0
    %v784 = vadd.f32 %v130, %v783
    %785 = vmatprep.mubr.bf16.mxu0 0
    %786 = vmatmul.mubr.bf16.gmra.mrb[0].mxu0 %v442
    %v787 = vpop.f32.mrb[0].mxu0
    %v788 = vadd.f32 %v126, %v787
    %v789 = vpop.f32.mrb[0].mxu0
    %v790 = vadd.f32 %v130, %v789
    %v791 = vpop.f32.mrb[0].mxu0
    %v792 = vadd.f32 %v126, %v791
    %v793 = vpop.f32.mrb[0].mxu0
    %v794 = vadd.f32 %v130, %v793
    %795 = vmatprep.mubr.bf16.mxu0 0
    %796 = vmatmul.mubr.bf16.gmra.mrb[0].mxu0 %v445
    %v797 = vpop.f32.mrb[0].mxu0
    %v798 = vadd.f32 %v126, %v797
    %v799 = vpop.f32.mrb[0].mxu0
    %v800 = vadd.f32 %v130, %v799
    %v801 = vpop.f32.mrb[0].mxu0
    %v802 = vadd.f32 %v126, %v801
    %v803 = vpop.f32.mrb[0].mxu0
    %v804 = vadd.f32 %v130, %v803
    %805 = vmatprep.mubr.bf16.mxu0 0
    %806 = vmatmul.mubr.bf16.gmra.mrb[0].mxu0 %v448
    %v807 = vpop.f32.mrb[0].mxu0
    %v808 = vadd.f32 %v126, %v807
    %v809 = vpop.f32.mrb[0].mxu0
    %v810 = vadd.f32 %v130, %v809
    %v811 = vpop.f32.mrb[0].mxu0
    %v812 = vadd.f32 %v126, %v811
    %v813 = vpop.f32.mrb[0].mxu0
    %v814 = vadd.f32 %v130, %v813
    %815 = vdwg.mxu0
    %816 = vmatprep.subr.bf16.mxu0 %v336
    %817 = vmatpush1.bf16.msra.mxu0 %v335
    %818 = vmatprep.subr.bf16.mxu0 %v340
    %819 = vmatpush1.bf16.msra.mxu0 %v339
    %820 = vmatprep.subr.bf16.mxu0 %v461
    %821 = vmatpush1.bf16.msra.mxu0 %v458
    %822 = vmatprep.subr.bf16.mxu0 0
    %823 = vmatpush1.bf16.msra.mxu0 0
    %824 = vmatprep.subr.bf16.mxu0 0
    %825 = vmatpush1.bf16.msra.mxu0 0
    %826 = vmatprep.subr.bf16.mxu0 0
    %827 = vmatpush1.bf16.msra.mxu0 0
    %828 = vmatprep.subr.bf16.mxu0 0
    %829 = vmatpush1.bf16.msra.mxu0 0
    %830 = vmatprep.subr.bf16.mxu0 0
    %831 = vmatpush1.bf16.msra.mxu0 0
    %832 = vmatprep.subr.bf16.mxu0 0
    %833 = vmatpush1.bf16.msra.mxu0 0
    %834 = vmatprep.subr.bf16.mxu0 0
    %835 = vmatpush1.bf16.msra.mxu0 0
    %836 = vmatprep.subr.bf16.mxu0 0
    %837 = vmatpush1.bf16.msra.mxu0 0
    %838 = vmatprep.subr.bf16.mxu0 0
    %839 = vmatpush1.bf16.msra.mxu0 0
    %840 = vmatprep.subr.bf16.mxu0 0
    %841 = vmatpush1.bf16.msra.mxu0 0
    %842 = vmatprep.subr.bf16.mxu0 0
    %843 = vmatpush1.bf16.msra.mxu0 0
    %844 = vmatprep.subr.bf16.mxu0 0
    %845 = vmatpush1.bf16.msra.mxu0 0
    %846 = vmatprep.subr.bf16.mxu0 0
    %847 = vmatpush1.bf16.msra.mxu0 0
    %848 = vmatprep.mubr.bf16.mxu0 0
    %849 = vmatmul.mubr.bf16.gmra.mrb[0].mxu0 %v355
    %v850 = vpop.f32.mrb[0].mxu0
    %v851 = vadd.f32 %v134, %v850
    %v852 = vpop.f32.mrb[0].mxu0
    %v853 = vadd.f32 %v138, %v852
    %v854 = vpop.f32.mrb[0].mxu0
    %v855 = vadd.f32 %v134, %v854
    %v856 = vpop.f32.mrb[0].mxu0
    %v857 = vadd.f32 %v138, %v856
    %858 = vmatprep.mubr.bf16.mxu0 0
    %859 = vmatmul.mubr.bf16.gmra.mrb[0].mxu0 %v358
    %v860 = vpop.f32.mrb[0].mxu0
    %v861 = vadd.f32 %v134, %v860
    %v862 = vpop.f32.mrb[0].mxu0
    %v863 = vadd.f32 %v138, %v862
    %v864 = vpop.f32.mrb[0].mxu0
    %v865 = vadd.f32 %v134, %v864
    %v866 = vpop.f32.mrb[0].mxu0
    %v867 = vadd.f32 %v138, %v866
    %868 = vmatprep.mubr.bf16.mxu0 0
    %869 = vmatmul.mubr.bf16.gmra.mrb[0].mxu0 %v361
    %v870 = vpop.f32.mrb[0].mxu0
    %v871 = vadd.f32 %v134, %v870
    %v872 = vpop.f32.mrb[0].mxu0
    %v873 = vadd.f32 %v138, %v872
    %v874 = vpop.f32.mrb[0].mxu0
    %v875 = vadd.f32 %v134, %v874
    %v876 = vpop.f32.mrb[0].mxu0
    %v877 = vadd.f32 %v138, %v876
    %878 = vmatprep.mubr.bf16.mxu0 0
    %879 = vmatmul.mubr.bf16.gmra.mrb[0].mxu0 %v364
    %v880 = vpop.f32.mrb[0].mxu0
    %v881 = vadd.f32 %v134, %v880
    %v882 = vpop.f32.mrb[0].mxu0
    %v883 = vadd.f32 %v138, %v882
    %v884 = vpop.f32.mrb[0].mxu0
    %v885 = vadd.f32 %v134, %v884
    %v886 = vpop.f32.mrb[0].mxu0
    %v887 = vadd.f32 %v138, %v886
    %888 = vmatprep.mubr.bf16.mxu0 0
    %889 = vmatmul.mubr.bf16.gmra.mrb[0].mxu0 %v367
    %v890 = vpop.f32.mrb[0].mxu0
    %v891 = vadd.f32 %v134, %v890
    %v892 = vpop.f32.mrb[0].mxu0
    %v893 = vadd.f32 %v138, %v892
    %v894 = vpop.f32.mrb[0].mxu0
    %v895 = vadd.f32 %v134, %v894
    %v896 = vpop.f32.mrb[0].mxu0
    %v897 = vadd.f32 %v138, %v896
    %898 = vmatprep.mubr.bf16.mxu0 0
    %899 = vmatmul.mubr.bf16.gmra.mrb[0].mxu0 %v370
    %v900 = vpop.f32.mrb[0].mxu0
    %v901 = vadd.f32 %v134, %v900
    %v902 = vpop.f32.mrb[0].mxu0
    %v903 = vadd.f32 %v138, %v902
    %v904 = vpop.f32.mrb[0].mxu0
    %v905 = vadd.f32 %v134, %v904
    %v906 = vpop.f32.mrb[0].mxu0
    %v907 = vadd.f32 %v138, %v906
    %908 = vmatprep.mubr.bf16.mxu0 0
    %909 = vmatmul.mubr.bf16.gmra.mrb[0].mxu0 %v373
    %v910 = vpop.f32.mrb[0].mxu0
    %v911 = vadd.f32 %v134, %v910
    %v912 = vpop.f32.mrb[0].mxu0
    %v913 = vadd.f32 %v138, %v912
    %v914 = vpop.f32.mrb[0].mxu0
    %v915 = vadd.f32 %v134, %v914
    %v916 = vpop.f32.mrb[0].mxu0
    %v917 = vadd.f32 %v138, %v916
    %918 = vmatprep.mubr.bf16.mxu0 0
    %919 = vmatmul.mubr.bf16.gmra.mrb[0].mxu0 %v376
    %v920 = vpop.f32.mrb[0].mxu0
    %v921 = vadd.f32 %v134, %v920
    %v922 = vpop.f32.mrb[0].mxu0
    %v923 = vadd.f32 %v138, %v922
    %v924 = vpop.f32.mrb[0].mxu0
    %v925 = vadd.f32 %v134, %v924
    %v926 = vpop.f32.mrb[0].mxu0
    %v927 = vadd.f32 %v138, %v926
    %928 = vmatprep.mubr.bf16.mxu0 0
    %929 = vmatmul.mubr.bf16.gmra.mrb[0].mxu0 %v379
    %v930 = vpop.f32.mrb[0].mxu0
    %v931 = vadd.f32 %v134, %v930
    %v932 = vpop.f32.mrb[0].mxu0
    %v933 = vadd.f32 %v138, %v932
    %v934 = vpop.f32.mrb[0].mxu0
    %v935 = vadd.f32 %v134, %v934
    %v936 = vpop.f32.mrb[0].mxu0
    %v937 = vadd.f32 %v138, %v936
    %938 = vmatprep.mubr.bf16.mxu0 0
    %939 = vmatmul.mubr.bf16.gmra.mrb[0].mxu0 %v382
    %v940 = vpop.f32.mrb[0].mxu0
    %v941 = vadd.f32 %v134, %v940
    %v942 = vpop.f32.mrb[0].mxu0
    %v943 = vadd.f32 %v138, %v942
    %v944 = vpop.f32.mrb[0].mxu0
    %v945 = vadd.f32 %v134, %v944
    %v946 = vpop.f32.mrb[0].mxu0
    %v947 = vadd.f32 %v138, %v946
    %948 = vmatprep.mubr.bf16.mxu0 0
    %949 = vmatmul.mubr.bf16.gmra.mrb[0].mxu0 %v385
    %v950 = vpop.f32.mrb[0].mxu0
    %v951 = vadd.f32 %v134, %v950
    %v952 = vpop.f32.mrb[0].mxu0
    %v953 = vadd.f32 %v138, %v952
    %v954 = vpop.f32.mrb[0].mxu0
    %v955 = vadd.f32 %v134, %v954
    %v956 = vpop.f32.mrb[0].mxu0
    %v957 = vadd.f32 %v138, %v956
    %958 = vmatprep.mubr.bf16.mxu0 0
    %959 = vmatmul.mubr.bf16.gmra.mrb[0].mxu0 %v388
    %v960 = vpop.f32.mrb[0].mxu0
    %v961 = vadd.f32 %v134, %v960
    %v962 = vpop.f32.mrb[0].mxu0
    %v963 = vadd.f32 %v138, %v962
    %v964 = vpop.f32.mrb[0].mxu0
    %v965 = vadd.f32 %v134, %v964
    %v966 = vpop.f32.mrb[0].mxu0
    %v967 = vadd.f32 %v138, %v966
    %968 = vmatprep.mubr.bf16.mxu0 0
    %969 = vmatmul.mubr.bf16.gmra.mrb[0].mxu0 %v391
    %v970 = vpop.f32.mrb[0].mxu0
    %v971 = vadd.f32 %v134, %v970
    %v972 = vpop.f32.mrb[0].mxu0
    %v973 = vadd.f32 %v138, %v972
    %v974 = vpop.f32.mrb[0].mxu0
    %v975 = vadd.f32 %v134, %v974
    %v976 = vpop.f32.mrb[0].mxu0
    %v977 = vadd.f32 %v138, %v976
    %978 = vmatprep.mubr.bf16.mxu0 0
    %979 = vmatmul.mubr.bf16.gmra.mrb[0].mxu0 %v394
    %v980 = vpop.f32.mrb[0].mxu0
    %v981 = vadd.f32 %v134, %v980
    %v982 = vpop.f32.mrb[0].mxu0
    %v983 = vadd.f32 %v138, %v982
    %v984 = vpop.f32.mrb[0].mxu0
    %v985 = vadd.f32 %v134, %v984
    %v986 = vpop.f32.mrb[0].mxu0
    %v987 = vadd.f32 %v138, %v986
    %988 = vmatprep.mubr.bf16.mxu0 0
    %989 = vmatmul.mubr.bf16.gmra.mrb[0].mxu0 %v397
    %v990 = vpop.f32.mrb[0].mxu0
    %v991 = vadd.f32 %v134, %v990
    %v992 = vpop.f32.mrb[0].mxu0
    %v993 = vadd.f32 %v138, %v992
    %v994 = vpop.f32.mrb[0].mxu0
    %v995 = vadd.f32 %v134, %v994
    %v996 = vpop.f32.mrb[0].mxu0
    %v997 = vadd.f32 %v138, %v996
    %998 = vmatprep.mubr.bf16.mxu0 0
    %999 = vmatmul.mubr.bf16.gmra.mrb[0].mxu0 %v400
    %v1000 = vpop.f32.mrb[0].mxu0
    %v1001 = vadd.f32 %v134, %v1000
    %v1002 = vpop.f32.mrb[0].mxu0
    %v1003 = vadd.f32 %v138, %v1002
    %v1004 = vpop.f32.mrb[0].mxu0
    %v1005 = vadd.f32 %v134, %v1004
    %v1006 = vpop.f32.mrb[0].mxu0
    %v1007 = vadd.f32 %v138, %v1006
    %1008 = vmatprep.mubr.bf16.mxu0 0
    %1009 = vmatmul.mubr.bf16.gmra.mrb[0].mxu0 %v403
    %v1010 = vpop.f32.mrb[0].mxu0
    %v1011 = vadd.f32 %v134, %v1010
    %v1012 = vpop.f32.mrb[0].mxu0
    %v1013 = vadd.f32 %v138, %v1012
    %v1014 = vpop.f32.mrb[0].mxu0
    %v1015 = vadd.f32 %v134, %v1014
    %v1016 = vpop.f32.mrb[0].mxu0
    %v1017 = vadd.f32 %v138, %v1016
    %1018 = vmatprep.mubr.bf16.mxu0 0
    %1019 = vmatmul.mubr.bf16.gmra.mrb[0].mxu0 %v406
    %v1020 = vpop.f32.mrb[0].mxu0
    %v1021 = vadd.f32 %v134, %v1020
    %v1022 = vpop.f32.mrb[0].mxu0
    %v1023 = vadd.f32 %v138, %v1022
    %v1024 = vpop.f32.mrb[0].mxu0
    %v1025 = vadd.f32 %v134, %v1024
    %v1026 = vpop.f32.mrb[0].mxu0
    %v1027 = vadd.f32 %v138, %v1026
    %1028 = vmatprep.mubr.bf16.mxu0 0
    %1029 = vmatmul.mubr.bf16.gmra.mrb[0].mxu0 %v409
    %v1030 = vpop.f32.mrb[0].mxu0
    %v1031 = vadd.f32 %v134, %v1030
    %v1032 = vpop.f32.mrb[0].mxu0
    %v1033 = vadd.f32 %v138, %v1032
    %v1034 = vpop.f32.mrb[0].mxu0
    %v1035 = vadd.f32 %v134, %v1034
    %v1036 = vpop.f32.mrb[0].mxu0
    %v1037 = vadd.f32 %v138, %v1036
    %1038 = vmatprep.mubr.bf16.mxu0 0
    %1039 = vmatmul.mubr.bf16.gmra.mrb[0].mxu0 %v412
    %v1040 = vpop.f32.mrb[0].mxu0
    %v1041 = vadd.f32 %v134, %v1040
    %v1042 = vpop.f32.mrb[0].mxu0
    %v1043 = vadd.f32 %v138, %v1042
    %v1044 = vpop.f32.mrb[0].mxu0
    %v1045 = vadd.f32 %v134, %v1044
    %v1046 = vpop.f32.mrb[0].mxu0
    %v1047 = vadd.f32 %v138, %v1046
    %1048 = vmatprep.mubr.bf16.mxu0 0
    %1049 = vmatmul.mubr.bf16.gmra.mrb[0].mxu0 %v415
    %v1050 = vpop.f32.mrb[0].mxu0
    %v1051 = vadd.f32 %v134, %v1050
    %v1052 = vpop.f32.mrb[0].mxu0
    %v1053 = vadd.f32 %v138, %v1052
    %v1054 = vpop.f32.mrb[0].mxu0
    %v1055 = vadd.f32 %v134, %v1054
    %v1056 = vpop.f32.mrb[0].mxu0
    %v1057 = vadd.f32 %v138, %v1056
    %1058 = vmatprep.mubr.bf16.mxu0 0
    %1059 = vmatmul.mubr.bf16.gmra.mrb[0].mxu0 %v418
    %v1060 = vpop.f32.mrb[0].mxu0
    %v1061 = vadd.f32 %v134, %v1060
    %v1062 = vpop.f32.mrb[0].mxu0
    %v1063 = vadd.f32 %v138, %v1062
    %v1064 = vpop.f32.mrb[0].mxu0
    %v1065 = vadd.f32 %v134, %v1064
    %v1066 = vpop.f32.mrb[0].mxu0
    %v1067 = vadd.f32 %v138, %v1066
    %1068 = vmatprep.mubr.bf16.mxu0 0
    %1069 = vmatmul.mubr.bf16.gmra.mrb[0].mxu0 %v421
    %v1070 = vpop.f32.mrb[0].mxu0
    %v1071 = vadd.f32 %v134, %v1070
    %v1072 = vpop.f32.mrb[0].mxu0
    %v1073 = vadd.f32 %v138, %v1072
    %v1074 = vpop.f32.mrb[0].mxu0
    %v1075 = vadd.f32 %v134, %v1074
    %v1076 = vpop.f32.mrb[0].mxu0
    %v1077 = vadd.f32 %v138, %v1076
    %1078 = vmatprep.mubr.bf16.mxu0 0
    %1079 = vmatmul.mubr.bf16.gmra.mrb[0].mxu0 %v424
    %v1080 = vpop.f32.mrb[0].mxu0
    %v1081 = vadd.f32 %v134, %v1080
    %v1082 = vpop.f32.mrb[0].mxu0
    %v1083 = vadd.f32 %v138, %v1082
    %v1084 = vpop.f32.mrb[0].mxu0
    %v1085 = vadd.f32 %v134, %v1084
    %v1086 = vpop.f32.mrb[0].mxu0
    %v1087 = vadd.f32 %v138, %v1086
    %1088 = vmatprep.mubr.bf16.mxu0 0
    %1089 = vmatmul.mubr.bf16.gmra.mrb[0].mxu0 %v427
    %v1090 = vpop.f32.mrb[0].mxu0
    %v1091 = vadd.f32 %v134, %v1090
    %v1092 = vpop.f32.mrb[0].mxu0
    %v1093 = vadd.f32 %v138, %v1092
    %v1094 = vpop.f32.mrb[0].mxu0
    %v1095 = vadd.f32 %v134, %v1094
    %v1096 = vpop.f32.mrb[0].mxu0
    %v1097 = vadd.f32 %v138, %v1096
    %1098 = vmatprep.mubr.bf16.mxu0 0
    %1099 = vmatmul.mubr.bf16.gmra.mrb[0].mxu0 %v430
    %v1100 = vpop.f32.mrb[0].mxu0
    %v1101 = vadd.f32 %v134, %v1100
    %v1102 = vpop.f32.mrb[0].mxu0
    %v1103 = vadd.f32 %v138, %v1102
    %v1104 = vpop.f32.mrb[0].mxu0
    %v1105 = vadd.f32 %v134, %v1104
    %v1106 = vpop.f32.mrb[0].mxu0
    %v1107 = vadd.f32 %v138, %v1106
    %1108 = vmatprep.mubr.bf16.mxu0 0
    %1109 = vmatmul.mubr.bf16.gmra.mrb[0].mxu0 %v433
    %v1110 = vpop.f32.mrb[0].mxu0
    %v1111 = vadd.f32 %v134, %v1110
    %v1112 = vpop.f32.mrb[0].mxu0
    %v1113 = vadd.f32 %v138, %v1112
    %v1114 = vpop.f32.mrb[0].mxu0
    %v1115 = vadd.f32 %v134, %v1114
    %v1116 = vpop.f32.mrb[0].mxu0
    %v1117 = vadd.f32 %v138, %v1116
    %1118 = vmatprep.mubr.bf16.mxu0 0
    %1119 = vmatmul.mubr.bf16.gmra.mrb[0].mxu0 %v436
    %v1120 = vpop.f32.mrb[0].mxu0
    %v1121 = vadd.f32 %v134, %v1120
    %v1122 = vpop.f32.mrb[0].mxu0
    %v1123 = vadd.f32 %v138, %v1122
    %v1124 = vpop.f32.mrb[0].mxu0
    %v1125 = vadd.f32 %v134, %v1124
    %v1126 = vpop.f32.mrb[0].mxu0
    %v1127 = vadd.f32 %v138, %v1126
    %1128 = vmatprep.mubr.bf16.mxu0 0
    %1129 = vmatmul.mubr.bf16.gmra.mrb[0].mxu0 %v439
    %v1130 = vpop.f32.mrb[0].mxu0
    %v1131 = vadd.f32 %v134, %v1130
    %v1132 = vpop.f32.mrb[0].mxu0
    %v1133 = vadd.f32 %v138, %v1132
    %v1134 = vpop.f32.mrb[0].mxu0
    %v1135 = vadd.f32 %v134, %v1134
    %v1136 = vpop.f32.mrb[0].mxu0
    %v1137 = vadd.f32 %v138, %v1136
    %1138 = vmatprep.mubr.bf16.mxu0 0
    %1139 = vmatmul.mubr.bf16.gmra.mrb[0].mxu0 %v442
    %v1140 = vpop.f32.mrb[0].mxu0
    %v1141 = vadd.f32 %v134, %v1140
    %v1142 = vpop.f32.mrb[0].mxu0
    %v1143 = vadd.f32 %v138, %v1142
    %v1144 = vpop.f32.mrb[0].mxu0
    %v1145 = vadd.f32 %v134, %v1144
    %v1146 = vpop.f32.mrb[0].mxu0
    %v1147 = vadd.f32 %v138, %v1146
    %1148 = vmatprep.mubr.bf16.mxu0 0
    %1149 = vmatmul.mubr.bf16.gmra.mrb[0].mxu0 %v445
    %v1150 = vpop.f32.mrb[0].mxu0
    %v1151 = vadd.f32 %v134, %v1150
    %v1152 = vpop.f32.mrb[0].mxu0
    %v1153 = vadd.f32 %v138, %v1152
    %v1154 = vpop.f32.mrb[0].mxu0
    %v1155 = vadd.f32 %v134, %v1154
    %v1156 = vpop.f32.mrb[0].mxu0
    %v1157 = vadd.f32 %v138, %v1156
    %1158 = vmatprep.mubr.bf16.mxu0 0
    %1159 = vmatmul.mubr.bf16.gmra.mrb[0].mxu0 %v448
    %v1160 = vpop.f32.mrb[0].mxu0
    %v1161 = vadd.f32 %v134, %v1160
    %v1162 = vpop.f32.mrb[0].mxu0
    %v1163 = vadd.f32 %v138, %v1162
    %v1164 = vpop.f32.mrb[0].mxu0
    %v1165 = vadd.f32 %v134, %v1164
    %v1166 = vpop.f32.mrb[0].mxu0
    %v1167 = vadd.f32 %v138, %v1166
    %1168 = vdwg.mxu0
    %v1169 = vmax.f32 %v498, 0.0
    %v1170 = vmax.f32 %v500, 0.0
    %v1171 = vmax.f32 %v851, 0.0
    %v1172 = vmax.f32 %v853, 0.0
    %v1173 = vmax.f32 %v502, 0.0
    %v1174 = vmax.f32 %v504, 0.0
    %v1175 = vmax.f32 %v855, 0.0
    %v1176 = vmax.f32 %v857, 0.0
    %v1177 = vmax.f32 %v508, 0.0
    %v1178 = vmax.f32 %v510, 0.0
    %v1179 = vmax.f32 %v861, 0.0
    %v1180 = vmax.f32 %v863, 0.0
    %v1181 = vmax.f32 %v512, 0.0
    %v1182 = vmax.f32 %v514, 0.0
    %v1183 = vmax.f32 %v865, 0.0
    %v1184 = vmax.f32 %v867, 0.0
    %v1185 = vmax.f32 %v518, 0.0
    %v1186 = vmax.f32 %v520, 0.0
    %v1187 = vmax.f32 %v871, 0.0
    %v1188 = vmax.f32 %v873, 0.0
    %v1189 = vmax.f32 %v522, 0.0
    %v1190 = vmax.f32 %v524, 0.0
    %v1191 = vmax.f32 %v875, 0.0
    %v1192 = vmax.f32 %v877, 0.0
    %v1193 = vmax.f32 %v528, 0.0
    %v1194 = vmax.f32 %v530, 0.0
    %v1195 = vmax.f32 %v881, 0.0
    %v1196 = vmax.f32 %v883, 0.0
    %v1197 = vmax.f32 %v532, 0.0
    %v1198 = vmax.f32 %v534, 0.0
    %v1199 = vmax.f32 %v885, 0.0
    %v1200 = vmax.f32 %v887, 0.0
    %v1201 = vmax.f32 %v538, 0.0
    %v1202 = vmax.f32 %v540, 0.0
    %v1203 = vmax.f32 %v891, 0.0
    %v1204 = vmax.f32 %v893, 0.0
    %v1205 = vmax.f32 %v542, 0.0
    %v1206 = vmax.f32 %v544, 0.0
    %v1207 = vmax.f32 %v895, 0.0
    %v1208 = vmax.f32 %v897, 0.0
    %v1209 = vmax.f32 %v548, 0.0
    %v1210 = vmax.f32 %v550, 0.0
    %v1211 = vmax.f32 %v901, 0.0
    %v1212 = vmax.f32 %v903, 0.0
    %v1213 = vmax.f32 %v552, 0.0
    %v1214 = vmax.f32 %v554, 0.0
    %v1215 = vmax.f32 %v905, 0.0
    %v1216 = vmax.f32 %v907, 0.0
    %v1217 = vmax.f32 %v558, 0.0
    %v1218 = vmax.f32 %v560, 0.0
    %v1219 = vmax.f32 %v911, 0.0
    %v1220 = vmax.f32 %v913, 0.0
    %v1221 = vmax.f32 %v562, 0.0
    %v1222 = vmax.f32 %v564, 0.0
    %v1223 = vmax.f32 %v915, 0.0
    %v1224 = vmax.f32 %v917, 0.0
    %v1225 = vmax.f32 %v568, 0.0
    %v1226 = vmax.f32 %v570, 0.0
    %v1227 = vmax.f32 %v921, 0.0
    %v1228 = vmax.f32 %v923, 0.0
    %v1229 = vmax.f32 %v572, 0.0
    %v1230 = vmax.f32 %v574, 0.0
    %v1231 = vmax.f32 %v925, 0.0
    %v1232 = vmax.f32 %v927, 0.0
    %v1233 = vmax.f32 %v578, 0.0
    %v1234 = vmax.f32 %v580, 0.0
    %v1235 = vmax.f32 %v931, 0.0
    %v1236 = vmax.f32 %v933, 0.0
    %v1237 = vmax.f32 %v582, 0.0
    %v1238 = vmax.f32 %v584, 0.0
    %v1239 = vmax.f32 %v935, 0.0
    %v1240 = vmax.f32 %v937, 0.0
    %v1241 = vmax.f32 %v588, 0.0
    %v1242 = vmax.f32 %v590, 0.0
    %v1243 = vmax.f32 %v941, 0.0
    %v1244 = vmax.f32 %v943, 0.0
    %v1245 = vmax.f32 %v592, 0.0
    %v1246 = vmax.f32 %v594, 0.0
    %v1247 = vmax.f32 %v945, 0.0
    %v1248 = vmax.f32 %v947, 0.0
    %v1249 = vmax.f32 %v598, 0.0
    %v1250 = vmax.f32 %v600, 0.0
    %v1251 = vmax.f32 %v951, 0.0
    %v1252 = vmax.f32 %v953, 0.0
    %v1253 = vmax.f32 %v602, 0.0
    %v1254 = vmax.f32 %v604, 0.0
    %v1255 = vmax.f32 %v955, 0.0
    %v1256 = vmax.f32 %v957, 0.0
    %v1257 = vmax.f32 %v608, 0.0
    %v1258 = vmax.f32 %v610, 0.0
    %v1259 = vmax.f32 %v961, 0.0
    %v1260 = vmax.f32 %v963, 0.0
    %v1261 = vmax.f32 %v612, 0.0
    %v1262 = vmax.f32 %v614, 0.0
    %v1263 = vmax.f32 %v965, 0.0
    %v1264 = vmax.f32 %v967, 0.0
    %v1265 = vmax.f32 %v618, 0.0
    %v1266 = vmax.f32 %v620, 0.0
    %v1267 = vmax.f32 %v971, 0.0
    %v1268 = vmax.f32 %v973, 0.0
    %v1269 = vmax.f32 %v622, 0.0
    %v1270 = vmax.f32 %v624, 0.0
    %v1271 = vmax.f32 %v975, 0.0
    %v1272 = vmax.f32 %v977, 0.0
    %v1273 = vmax.f32 %v628, 0.0
    %v1274 = vmax.f32 %v630, 0.0
    %v1275 = vmax.f32 %v981, 0.0
    %v1276 = vmax.f32 %v983, 0.0
    %v1277 = vmax.f32 %v632, 0.0
    %v1278 = vmax.f32 %v634, 0.0
    %v1279 = vmax.f32 %v985, 0.0
    %v1280 = vmax.f32 %v987, 0.0
    %v1281 = vmax.f32 %v638, 0.0
    %v1282 = vmax.f32 %v640, 0.0
    %v1283 = vmax.f32 %v991, 0.0
    %v1284 = vmax.f32 %v993, 0.0
    %v1285 = vmax.f32 %v642, 0.0
    %v1286 = vmax.f32 %v644, 0.0
    %v1287 = vmax.f32 %v995, 0.0
    %v1288 = vmax.f32 %v997, 0.0
    %v1289 = vmax.f32 %v648, 0.0
    %v1290 = vmax.f32 %v650, 0.0
    %v1291 = vmax.f32 %v1001, 0.0
    %v1292 = vmax.f32 %v1003, 0.0
    %v1293 = vmax.f32 %v652, 0.0
    %v1294 = vmax.f32 %v654, 0.0
    %v1295 = vmax.f32 %v1005, 0.0
    %v1296 = vmax.f32 %v1007, 0.0
    %v1297 = vmax.f32 %v658, 0.0
    %v1298 = vmax.f32 %v660, 0.0
    %v1299 = vmax.f32 %v1011, 0.0
    %v1300 = vmax.f32 %v1013, 0.0
    %v1301 = vmax.f32 %v662, 0.0
    %v1302 = vmax.f32 %v664, 0.0
    %v1303 = vmax.f32 %v1015, 0.0
    %v1304 = vmax.f32 %v1017, 0.0
    %v1305 = vmax.f32 %v668, 0.0
    %v1306 = vmax.f32 %v670, 0.0
    %v1307 = vmax.f32 %v1021, 0.0
    %v1308 = vmax.f32 %v1023, 0.0
    %v1309 = vmax.f32 %v672, 0.0
    %v1310 = vmax.f32 %v674, 0.0
    %v1311 = vmax.f32 %v1025, 0.0
    %v1312 = vmax.f32 %v1027, 0.0
    %v1313 = vmax.f32 %v678, 0.0
    %v1314 = vmax.f32 %v680, 0.0
    %v1315 = vmax.f32 %v1031, 0.0
    %v1316 = vmax.f32 %v1033, 0.0
    %v1317 = vmax.f32 %v682, 0.0
    %v1318 = vmax.f32 %v684, 0.0
    %v1319 = vmax.f32 %v1035, 0.0
    %v1320 = vmax.f32 %v1037, 0.0
    %v1321 = vmax.f32 %v688, 0.0
    %v1322 = vmax.f32 %v690, 0.0
    %v1323 = vmax.f32 %v1041, 0.0
    %v1324 = vmax.f32 %v1043, 0.0
    %v1325 = vmax.f32 %v692, 0.0
    %v1326 = vmax.f32 %v694, 0.0
    %v1327 = vmax.f32 %v1045, 0.0
    %v1328 = vmax.f32 %v1047, 0.0
    %v1329 = vmax.f32 %v698, 0.0
    %v1330 = vmax.f32 %v700, 0.0
    %v1331 = vmax.f32 %v1051, 0.0
    %v1332 = vmax.f32 %v1053, 0.0
    %v1333 = vmax.f32 %v702, 0.0
    %v1334 = vmax.f32 %v704, 0.0
    %v1335 = vmax.f32 %v1055, 0.0
    %v1336 = vmax.f32 %v1057, 0.0
    %v1337 = vmax.f32 %v708, 0.0
    %v1338 = vmax.f32 %v710, 0.0
    %v1339 = vmax.f32 %v1061, 0.0
    %v1340 = vmax.f32 %v1063, 0.0
    %v1341 = vmax.f32 %v712, 0.0
    %v1342 = vmax.f32 %v714, 0.0
    %v1343 = vmax.f32 %v1065, 0.0
    %v1344 = vmax.f32 %v1067, 0.0
    %v1345 = vmax.f32 %v718, 0.0
    %v1346 = vmax.f32 %v720, 0.0
    %v1347 = vmax.f32 %v1071, 0.0
    %v1348 = vmax.f32 %v1073, 0.0
    %v1349 = vmax.f32 %v722, 0.0
    %v1350 = vmax.f32 %v724, 0.0
    %v1351 = vmax.f32 %v1075, 0.0
    %v1352 = vmax.f32 %v1077, 0.0
    %v1353 = vmax.f32 %v728, 0.0
    %v1354 = vmax.f32 %v730, 0.0
    %v1355 = vmax.f32 %v1081, 0.0
    %v1356 = vmax.f32 %v1083, 0.0
    %v1357 = vmax.f32 %v732, 0.0
    %v1358 = vmax.f32 %v734, 0.0
    %v1359 = vmax.f32 %v1085, 0.0
    %v1360 = vmax.f32 %v1087, 0.0
    %v1361 = vmax.f32 %v738, 0.0
    %v1362 = vmax.f32 %v740, 0.0
    %v1363 = vmax.f32 %v1091, 0.0
    %v1364 = vmax.f32 %v1093, 0.0
    %v1365 = vmax.f32 %v742, 0.0
    %v1366 = vmax.f32 %v744, 0.0
    %v1367 = vmax.f32 %v1095, 0.0
    %v1368 = vmax.f32 %v1097, 0.0
    %v1369 = vmax.f32 %v748, 0.0
    %v1370 = vmax.f32 %v750, 0.0
    %v1371 = vmax.f32 %v1101, 0.0
    %v1372 = vmax.f32 %v1103, 0.0
    %v1373 = vmax.f32 %v752, 0.0
    %v1374 = vmax.f32 %v754, 0.0
    %v1375 = vmax.f32 %v1105, 0.0
    %v1376 = vmax.f32 %v1107, 0.0
    %v1377 = vmax.f32 %v758, 0.0
    %v1378 = vmax.f32 %v760, 0.0
    %v1379 = vmax.f32 %v1111, 0.0
    %v1380 = vmax.f32 %v1113, 0.0
    %v1381 = vmax.f32 %v762, 0.0
    %v1382 = vmax.f32 %v764, 0.0
    %v1383 = vmax.f32 %v1115, 0.0
    %v1384 = vmax.f32 %v1117, 0.0
    %v1385 = vmax.f32 %v768, 0.0
    %v1386 = vmax.f32 %v770, 0.0
    %v1387 = vmax.f32 %v1121, 0.0
    %v1388 = vmax.f32 %v1123, 0.0
    %v1389 = vmax.f32 %v772, 0.0
    %v1390 = vmax.f32 %v774, 0.0
    %v1391 = vmax.f32 %v1125, 0.0
    %v1392 = vmax.f32 %v1127, 0.0
    %v1393 = vmax.f32 %v778, 0.0
    %v1394 = vmax.f32 %v780, 0.0
    %v1395 = vmax.f32 %v1131, 0.0
    %v1396 = vmax.f32 %v1133, 0.0
    %v1397 = vmax.f32 %v782, 0.0
    %v1398 = vmax.f32 %v784, 0.0
    %v1399 = vmax.f32 %v1135, 0.0
    %v1400 = vmax.f32 %v1137, 0.0
    %v1401 = vmax.f32 %v788, 0.0
    %v1402 = vmax.f32 %v790, 0.0
    %v1403 = vmax.f32 %v1141, 0.0
    %v1404 = vmax.f32 %v1143, 0.0
    %v1405 = vmax.f32 %v792, 0.0
    %v1406 = vmax.f32 %v794, 0.0
    %v1407 = vmax.f32 %v1145, 0.0
    %v1408 = vmax.f32 %v1147, 0.0
    %v1409 = vmax.f32 %v798, 0.0
    %v1410 = vmax.f32 %v800, 0.0
    %v1411 = vmax.f32 %v1151, 0.0
    %v1412 = vmax.f32 %v1153, 0.0
    %v1413 = vmax.f32 %v802, 0.0
    %v1414 = vmax.f32 %v804, 0.0
    %v1415 = vmax.f32 %v1155, 0.0
    %v1416 = vmax.f32 %v1157, 0.0
    %v1417 = vmax.f32 %v808, 0.0
    %v1418 = vmax.f32 %v810, 0.0
    %v1419 = vmax.f32 %v1161, 0.0
    %v1420 = vmax.f32 %v1163, 0.0
    %v1421 = vmax.f32 %v812, 0.0
    %v1422 = vmax.f32 %v814, 0.0
    %v1423 = vmax.f32 %v1165, 0.0
    %v1424 = vmax.f32 %v1167, 0.0
    %v1425 = vld [vmem:[#allocation2] sm:$0xff]
    %v1426 = vadd.f32 %v1169, %v1173
    %v1427 = vadd.f32 %v1426, %v1177
    %v1428 = vadd.f32 %v1427, %v1181
    %v1429 = vadd.f32 %v1428, %v1185
    %v1430 = vadd.f32 %v1429, %v1189
    %v1431 = vadd.f32 %v1430, %v1193
    %v1432 = vadd.f32 %v1431, %v1197
    %v1433 = vadd.f32 %v1432, %v1201
    %v1434 = vadd.f32 %v1433, %v1205
    %v1435 = vadd.f32 %v1434, %v1209
    %v1436 = vadd.f32 %v1435, %v1213
    %v1437 = vadd.f32 %v1436, %v1217
    %v1438 = vadd.f32 %v1437, %v1221
    %v1439 = vadd.f32 %v1438, %v1225
    %v1440 = vadd.f32 %v1439, %v1229
    %v1441 = vadd.f32 %v1440, %v1233
    %v1442 = vadd.f32 %v1441, %v1237
    %v1443 = vadd.f32 %v1442, %v1241
    %v1444 = vadd.f32 %v1443, %v1245
    %v1445 = vadd.f32 %v1444, %v1249
    %v1446 = vadd.f32 %v1445, %v1253
    %v1447 = vadd.f32 %v1446, %v1257
    %v1448 = vadd.f32 %v1447, %v1261
    %v1449 = vadd.f32 %v1448, %v1265
    %v1450 = vadd.f32 %v1449, %v1269
    %v1451 = vadd.f32 %v1450, %v1273
    %v1452 = vadd.f32 %v1451, %v1277
    %v1453 = vadd.f32 %v1452, %v1281
    %v1454 = vadd.f32 %v1453, %v1285
    %v1455 = vadd.f32 %v1454, %v1289
    %v1456 = vadd.f32 %v1455, %v1293
    %v1457 = vrot.slane %v1456, 4
    %v1458 = vadd.f32 %v1456, %v1457
    %v1459 = vrot.slane %v1458, 2
    %v1460 = vadd.f32 %v1458, %v1459
    %v1461 = vrot.slane %v1460, 1
    %v1462 = vadd.f32 %v1460, %v1461
    %v1463 = vadd.f32 %v1170, %v1174
    %v1464 = vadd.f32 %v1463, %v1178
    %v1465 = vadd.f32 %v1464, %v1182
    %v1466 = vadd.f32 %v1465, %v1186
    %v1467 = vadd.f32 %v1466, %v1190
    %v1468 = vadd.f32 %v1467, %v1194
    %v1469 = vadd.f32 %v1468, %v1198
    %v1470 = vadd.f32 %v1469, %v1202
    %v1471 = vadd.f32 %v1470, %v1206
    %v1472 = vadd.f32 %v1471, %v1210
    %v1473 = vadd.f32 %v1472, %v1214
    %v1474 = vadd.f32 %v1473, %v1218
    %v1475 = vadd.f32 %v1474, %v1222
    %v1476 = vadd.f32 %v1475, %v1226
    %v1477 = vadd.f32 %v1476, %v1230
    %v1478 = vadd.f32 %v1477, %v1234
    %v1479 = vadd.f32 %v1478, %v1238
    %v1480 = vadd.f32 %v1479, %v1242
    %v1481 = vadd.f32 %v1480, %v1246
    %v1482 = vadd.f32 %v1481, %v1250
    %v1483 = vadd.f32 %v1482, %v1254
    %v1484 = vadd.f32 %v1483, %v1258
    %v1485 = vadd.f32 %v1484, %v1262
    %v1486 = vadd.f32 %v1485, %v1266
    %v1487 = vadd.f32 %v1486, %v1270
    %v1488 = vadd.f32 %v1487, %v1274
    %v1489 = vadd.f32 %v1488, %v1278
    %v1490 = vadd.f32 %v1489, %v1282
    %v1491 = vadd.f32 %v1490, %v1286
    %v1492 = vadd.f32 %v1491, %v1290
    %v1493 = vadd.f32 %v1492, %v1294
    %v1494 = vrot.slane %v1493, 4
    %v1495 = vadd.f32 %v1493, %v1494
    %v1496 = vrot.slane %v1495, 2
    %v1497 = vadd.f32 %v1495, %v1496
    %v1498 = vrot.slane %v1497, 1
    %v1499 = vadd.f32 %v1497, %v1498
    %v1500 = vadd.f32 %v1171, %v1175
    %v1501 = vadd.f32 %v1500, %v1179
    %v1502 = vadd.f32 %v1501, %v1183
    %v1503 = vadd.f32 %v1502, %v1187
    %v1504 = vadd.f32 %v1503, %v1191
    %v1505 = vadd.f32 %v1504, %v1195
    %v1506 = vadd.f32 %v1505, %v1199
    %v1507 = vadd.f32 %v1506, %v1203
    %v1508 = vadd.f32 %v1507, %v1207
    %v1509 = vadd.f32 %v1508, %v1211
    %v1510 = vadd.f32 %v1509, %v1215
    %v1511 = vadd.f32 %v1510, %v1219
    %v1512 = vadd.f32 %v1511, %v1223
    %v1513 = vadd.f32 %v1512, %v1227
    %v1514 = vadd.f32 %v1513, %v1231
    %v1515 = vadd.f32 %v1514, %v1235
    %v1516 = vadd.f32 %v1515, %v1239
    %v1517 = vadd.f32 %v1516, %v1243
    %v1518 = vadd.f32 %v1517, %v1247
    %v1519 = vadd.f32 %v1518, %v1251
    %v1520 = vadd.f32 %v1519, %v1255
    %v1521 = vadd.f32 %v1520, %v1259
    %v1522 = vadd.f32 %v1521, %v1263
    %v1523 = vadd.f32 %v1522, %v1267
    %v1524 = vadd.f32 %v1523, %v1271
    %v1525 = vadd.f32 %v1524, %v1275
    %v1526 = vadd.f32 %v1525, %v1279
    %v1527 = vadd.f32 %v1526, %v1283
    %v1528 = vadd.f32 %v1527, %v1287
    %v1529 = vadd.f32 %v1528, %v1291
    %v1530 = vadd.f32 %v1529, %v1295
    %v1531 = vrot.slane %v1530, 4
    %v1532 = vadd.f32 %v1530, %v1531
    %v1533 = vrot.slane %v1532, 2
    %v1534 = vadd.f32 %v1532, %v1533
    %v1535 = vrot.slane %v1534, 1
    %v1536 = vadd.f32 %v1534, %v1535
    %v1537 = vadd.f32 %v1172, %v1176
    %v1538 = vadd.f32 %v1537, %v1180
    %v1539 = vadd.f32 %v1538, %v1184
    %v1540 = vadd.f32 %v1539, %v1188
    %v1541 = vadd.f32 %v1540, %v1192
    %v1542 = vadd.f32 %v1541, %v1196
    %v1543 = vadd.f32 %v1542, %v1200
    %v1544 = vadd.f32 %v1543, %v1204
    %v1545 = vadd.f32 %v1544, %v1208
    %v1546 = vadd.f32 %v1545, %v1212
    %v1547 = vadd.f32 %v1546, %v1216
    %v1548 = vadd.f32 %v1547, %v1220
    %v1549 = vadd.f32 %v1548, %v1224
    %v1550 = vadd.f32 %v1549, %v1228
    %v1551 = vadd.f32 %v1550, %v1232
    %v1552 = vadd.f32 %v1551, %v1236
    %v1553 = vadd.f32 %v1552, %v1240
    %v1554 = vadd.f32 %v1553, %v1244
    %v1555 = vadd.f32 %v1554, %v1248
    %v1556 = vadd.f32 %v1555, %v1252
    %v1557 = vadd.f32 %v1556, %v1256
    %v1558 = vadd.f32 %v1557, %v1260
    %v1559 = vadd.f32 %v1558, %v1264
    %v1560 = vadd.f32 %v1559, %v1268
    %v1561 = vadd.f32 %v1560, %v1272
    %v1562 = vadd.f32 %v1561, %v1276
    %v1563 = vadd.f32 %v1562, %v1280
    %v1564 = vadd.f32 %v1563, %v1284
    %v1565 = vadd.f32 %v1564, %v1288
    %v1566 = vadd.f32 %v1565, %v1292
    %v1567 = vadd.f32 %v1566, %v1296
    %v1568 = vrot.slane %v1567, 4
    %v1569 = vadd.f32 %v1567, %v1568
    %v1570 = vrot.slane %v1569, 2
    %v1571 = vadd.f32 %v1569, %v1570
    %v1572 = vrot.slane %v1571, 1
    %v1573 = vadd.f32 %v1571, %v1572
    %v1574 = vadd.f32 %v1297, %v1301
    %v1575 = vadd.f32 %v1574, %v1305
    %v1576 = vadd.f32 %v1575, %v1309
    %v1577 = vadd.f32 %v1576, %v1313
    %v1578 = vadd.f32 %v1577, %v1317
    %v1579 = vadd.f32 %v1578, %v1321
    %v1580 = vadd.f32 %v1579, %v1325
    %v1581 = vadd.f32 %v1580, %v1329
    %v1582 = vadd.f32 %v1581, %v1333
    %v1583 = vadd.f32 %v1582, %v1337
    %v1584 = vadd.f32 %v1583, %v1341
    %v1585 = vadd.f32 %v1584, %v1345
    %v1586 = vadd.f32 %v1585, %v1349
    %v1587 = vadd.f32 %v1586, %v1353
    %v1588 = vadd.f32 %v1587, %v1357
    %v1589 = vadd.f32 %v1588, %v1361
    %v1590 = vadd.f32 %v1589, %v1365
    %v1591 = vadd.f32 %v1590, %v1369
    %v1592 = vadd.f32 %v1591, %v1373
    %v1593 = vadd.f32 %v1592, %v1377
    %v1594 = vadd.f32 %v1593, %v1381
    %v1595 = vadd.f32 %v1594, %v1385
    %v1596 = vadd.f32 %v1595, %v1389
    %v1597 = vadd.f32 %v1596, %v1393
    %v1598 = vadd.f32 %v1597, %v1397
    %v1599 = vadd.f32 %v1598, %v1401
    %v1600 = vadd.f32 %v1599, %v1405
    %v1601 = vadd.f32 %v1600, %v1409
    %v1602 = vadd.f32 %v1601, %v1413
    %v1603 = vadd.f32 %v1602, %v1417
    %v1604 = vadd.f32 %v1603, %v1421
    %v1605 = vrot.slane %v1604, 4
    %v1606 = vadd.f32 %v1604, %v1605
    %v1607 = vrot.slane %v1606, 2
    %v1608 = vadd.f32 %v1606, %v1607
    %v1609 = vrot.slane %v1608, 1
    %v1610 = vadd.f32 %v1608, %v1609
    %v1611 = vadd.f32 %v1298, %v1302
    %v1612 = vadd.f32 %v1611, %v1306
    %v1613 = vadd.f32 %v1612, %v1310
    %v1614 = vadd.f32 %v1613, %v1314
    %v1615 = vadd.f32 %v1614, %v1318
    %v1616 = vadd.f32 %v1615, %v1322
    %v1617 = vadd.f32 %v1616, %v1326
    %v1618 = vadd.f32 %v1617, %v1330
    %v1619 = vadd.f32 %v1618, %v1334
    %v1620 = vadd.f32 %v1619, %v1338
    %v1621 = vadd.f32 %v1620, %v1342
    %v1622 = vadd.f32 %v1621, %v1346
    %v1623 = vadd.f32 %v1622, %v1350
    %v1624 = vadd.f32 %v1623, %v1354
    %v1625 = vadd.f32 %v1624, %v1358
    %v1626 = vadd.f32 %v1625, %v1362
    %v1627 = vadd.f32 %v1626, %v1366
    %v1628 = vadd.f32 %v1627, %v1370
    %v1629 = vadd.f32 %v1628, %v1374
    %v1630 = vadd.f32 %v1629, %v1378
    %v1631 = vadd.f32 %v1630, %v1382
    %v1632 = vadd.f32 %v1631, %v1386
    %v1633 = vadd.f32 %v1632, %v1390
    %v1634 = vadd.f32 %v1633, %v1394
    %v1635 = vadd.f32 %v1634, %v1398
    %v1636 = vadd.f32 %v1635, %v1402
    %v1637 = vadd.f32 %v1636, %v1406
    %v1638 = vadd.f32 %v1637, %v1410
    %v1639 = vadd.f32 %v1638, %v1414
    %v1640 = vadd.f32 %v1639, %v1418
    %v1641 = vadd.f32 %v1640, %v1422
    %v1642 = vrot.slane %v1641, 4
    %v1643 = vadd.f32 %v1641, %v1642
    %v1644 = vrot.slane %v1643, 2
    %v1645 = vadd.f32 %v1643, %v1644
    %v1646 = vrot.slane %v1645, 1
    %v1647 = vadd.f32 %v1645, %v1646
    %v1648 = vadd.f32 %v1299, %v1303
    %v1649 = vadd.f32 %v1648, %v1307
    %v1650 = vadd.f32 %v1649, %v1311
    %v1651 = vadd.f32 %v1650, %v1315
    %v1652 = vadd.f32 %v1651, %v1319
    %v1653 = vadd.f32 %v1652, %v1323
    %v1654 = vadd.f32 %v1653, %v1327
    %v1655 = vadd.f32 %v1654, %v1331
    %v1656 = vadd.f32 %v1655, %v1335
    %v1657 = vadd.f32 %v1656, %v1339
    %v1658 = vadd.f32 %v1657, %v1343
    %v1659 = vadd.f32 %v1658, %v1347
    %v1660 = vadd.f32 %v1659, %v1351
    %v1661 = vadd.f32 %v1660, %v1355
    %v1662 = vadd.f32 %v1661, %v1359
    %v1663 = vadd.f32 %v1662, %v1363
    %v1664 = vadd.f32 %v1663, %v1367
    %v1665 = vadd.f32 %v1664, %v1371
    %v1666 = vadd.f32 %v1665, %v1375
    %v1667 = vadd.f32 %v1666, %v1379
    %v1668 = vadd.f32 %v1667, %v1383
    %v1669 = vadd.f32 %v1668, %v1387
    %v1670 = vadd.f32 %v1669, %v1391
    %v1671 = vadd.f32 %v1670, %v1395
    %v1672 = vadd.f32 %v1671, %v1399
    %v1673 = vadd.f32 %v1672, %v1403
    %v1674 = vadd.f32 %v1673, %v1407
    %v1675 = vadd.f32 %v1674, %v1411
    %v1676 = vadd.f32 %v1675, %v1415
    %v1677 = vadd.f32 %v1676, %v1419
    %v1678 = vadd.f32 %v1677, %v1423
    %v1679 = vrot.slane %v1678, 4
    %v1680 = vadd.f32 %v1678, %v1679
    %v1681 = vrot.slane %v1680, 2
    %v1682 = vadd.f32 %v1680, %v1681
    %v1683 = vrot.slane %v1682, 1
    %v1684 = vadd.f32 %v1682, %v1683
    %v1685 = vadd.f32 %v1300, %v1304
    %v1686 = vadd.f32 %v1685, %v1308
    %v1687 = vadd.f32 %v1686, %v1312
    %v1688 = vadd.f32 %v1687, %v1316
    %v1689 = vadd.f32 %v1688, %v1320
    %v1690 = vadd.f32 %v1689, %v1324
    %v1691 = vadd.f32 %v1690, %v1328
    %v1692 = vadd.f32 %v1691, %v1332
    %v1693 = vadd.f32 %v1692, %v1336
    %v1694 = vadd.f32 %v1693, %v1340
    %v1695 = vadd.f32 %v1694, %v1344
    %v1696 = vadd.f32 %v1695, %v1348
    %v1697 = vadd.f32 %v1696, %v1352
    %v1698 = vadd.f32 %v1697, %v1356
    %v1699 = vadd.f32 %v1698, %v1360
    %v1700 = vadd.f32 %v1699, %v1364
    %v1701 = vadd.f32 %v1700, %v1368
    %v1702 = vadd.f32 %v1701, %v1372
    %v1703 = vadd.f32 %v1702, %v1376
    %v1704 = vadd.f32 %v1703, %v1380
    %v1705 = vadd.f32 %v1704, %v1384
    %v1706 = vadd.f32 %v1705, %v1388
    %v1707 = vadd.f32 %v1706, %v1392
    %v1708 = vadd.f32 %v1707, %v1396
    %v1709 = vadd.f32 %v1708, %v1400
    %v1710 = vadd.f32 %v1709, %v1404
    %v1711 = vadd.f32 %v1710, %v1408
    %v1712 = vadd.f32 %v1711, %v1412
    %v1713 = vadd.f32 %v1712, %v1416
    %v1714 = vadd.f32 %v1713, %v1420
    %v1715 = vadd.f32 %v1714, %v1424
    %v1716 = vrot.slane %v1715, 4
    %v1717 = vadd.f32 %v1715, %v1716
    %v1718 = vrot.slane %v1717, 2
    %v1719 = vadd.f32 %v1717, %v1718
    %v1720 = vrot.slane %v1719, 1
    %v1721 = vadd.f32 %v1719, %v1720
    %v1730 = vcombine.low %v1462, %v1499
    %v1731 = vcombine.low %v1536, %v1573
    %v1733 = vunpack.c.l.s4 1983009808
    %v1734 = vunpack.c.0.s8 %v1733
    %v1735 = vlaneseq
    %v1736 = vshrl.u32 %v1735, 7
    %v1737 = vsub.s32 %v1734, %v1736
    %v1738 = vrot.slane %v1730, %v1737
    %v1740 = vunpack.c.l.s4 1983009808
    %v1741 = vunpack.c.0.s8 %v1740
    %v1742 = vlaneseq
    %v1743 = vshrl.u32 %v1742, 7
    %v1744 = vsub.s32 %v1741, %v1743
    %v1745 = vrot.slane %v1731, %v1744
    %v1746 = vcombine.low %v1738, %v1745
    %v1747 = vcombine.low %v1610, %v1647
    %v1748 = vcombine.low %v1684, %v1721
    %v1750 = vunpack.c.l.s4 1983009808
    %v1751 = vunpack.c.0.s8 %v1750
    %v1752 = vlaneseq
    %v1753 = vshrl.u32 %v1752, 7
    %v1754 = vsub.s32 %v1751, %v1753
    %v1755 = vrot.slane %v1747, %v1754
    %v1757 = vunpack.c.l.s4 1983009808
    %v1758 = vunpack.c.0.s8 %v1757
    %v1759 = vlaneseq
    %v1760 = vshrl.u32 %v1759, 7
    %v1761 = vsub.s32 %v1758, %v1760
    %v1762 = vrot.slane %v1748, %v1761
    %v1763 = vcombine.low %v1755, %v1762
    %vm1764 = vcmask 1044484
    %v1765 = vsel %vm1764, %v1746, %v1746
    %vm1766 = vcmask 1046534
    %v1767 = vsel %vm1766, %v1746, %v1765
    %v1768 = vrot.slane %v1763, 7
    %vm1769 = vcmask 1041409
    %v1770 = vsel %vm1769, %v1768, %v1767
    %vm1771 = vcmask 1043459
    %v1772 = vsel %vm1771, %v1768, %v1770
    %vm1773 = vcmask 1045509
    %v1774 = vsel %vm1773, %v1768, %v1772
    %vm1775 = vcmask 1047559
    %v1776 = vsel %vm1775, %v1768, %v1774
    %v1778 = vadd.f32 %v1425, %v1776
    %1779 = vst [vmem:[#allocation2] sm:$0xff] %v1778
    // Predicated region
    $region38: #{tpu_custom_call.1} parent=1 // pred_check
      %p1780 = pneg %p42
    $region39: #{tpu_custom_call.1} parent=1 // pred_check_branch
      %1782 = sbr.rel (%p1780) target = $region41
    $region40: #{tpu_custom_call.1} parent=1 // pred_region
      %v1783 = vld [vmem:[#allocation2] sm:$0xff]
      %v1784 = vmul.f32 %v1783, 0.00390625
      %v1786 = vcombine.high %v1784, %v1784
      %v1788 = vunpack.c.l.s4 1983009808
      %v1789 = vunpack.c.0.s8 %v1788
      %v1790 = vlaneseq
      %v1791 = vshrl.u32 %v1790, 7
      %v1792 = vsub.s32 %v1789, %v1791
      %v1793 = vrot.slane %v1784, %v1792
      %v1795 = vunpack.c.l.s4 1983009808
      %v1796 = vunpack.c.0.s8 %v1795
      %v1797 = vlaneseq
      %v1798 = vshrl.u32 %v1797, 7
      %v1799 = vsub.s32 %v1796, %v1798
      %v1800 = vrot.slane %v1786, %v1799
      %v1801 = vcombine.high %v1793, %v1793
      %v1802 = vcombine.high %v1800, %v1800
      %v1807 = vpack.c.bf16 %v1793, %v1793
      %v1808 = vpack.c.bf16 %v1801, %v1801
      %v1809 = vpack.c.bf16 %v1800, %v1800
      %v1810 = vpack.c.bf16 %v1802, %v1802
      %v1811 = vld [vmem:[#allocation3] sm:$0xff]
      %v1812 = vld [vmem:[#allocation3 + $0x8] sm:$0xff]
      %v1813 = vld [vmem:[#allocation3 + $0x10] sm:$0xff]
      %v1814 = vld [vmem:[#allocation3 + $0x18] sm:$0xff]
      %v1815 = vld [vmem:[#allocation3 + $0x20] sm:$0xff]
      %v1816 = vld [vmem:[#allocation3 + $0x28] sm:$0xff]
      %v1817 = vld [vmem:[#allocation3 + $0x30] sm:$0xff]
      %v1818 = vld [vmem:[#allocation3 + $0x38] sm:$0xff]
      %v1819 = vld [vmem:[#allocation3 + $0x40] sm:$0xff]
      %v1820 = vld [vmem:[#allocation3 + $0x48] sm:$0xff]
      %v1821 = vld [vmem:[#allocation3 + $0x50] sm:$0xff]
      %v1822 = vld [vmem:[#allocation3 + $0x58] sm:$0xff]
      %v1823 = vld [vmem:[#allocation3 + $0x60] sm:$0xff]
      %v1824 = vld [vmem:[#allocation3 + $0x68] sm:$0xff]
      %v1825 = vld [vmem:[#allocation3 + $0x70] sm:$0xff]
      %v1826 = vld [vmem:[#allocation3 + $0x78] sm:$0xff]
      %v1827 = vld [vmem:[#allocation3 + $0x80] sm:$0xff]
      %v1828 = vld [vmem:[#allocation3 + $0x88] sm:$0xff]
      %v1829 = vld [vmem:[#allocation3 + $0x90] sm:$0xff]
      %v1830 = vld [vmem:[#allocation3 + $0x98] sm:$0xff]
      %v1831 = vld [vmem:[#allocation3 + $0xa0] sm:$0xff]
      %v1832 = vld [vmem:[#allocation3 + $0xa8] sm:$0xff]
      %v1833 = vld [vmem:[#allocation3 + $0xb0] sm:$0xff]
      %v1834 = vld [vmem:[#allocation3 + $0xb8] sm:$0xff]
      %v1835 = vld [vmem:[#allocation3 + $0xc0] sm:$0xff]
      %v1836 = vld [vmem:[#allocation3 + $0xc8] sm:$0xff]
      %v1837 = vld [vmem:[#allocation3 + $0xd0] sm:$0xff]
      %v1838 = vld [vmem:[#allocation3 + $0xd8] sm:$0xff]
      %v1839 = vld [vmem:[#allocation3 + $0xe0] sm:$0xff]
      %v1840 = vld [vmem:[#allocation3 + $0xe8] sm:$0xff]
      %v1841 = vld [vmem:[#allocation3 + $0xf0] sm:$0xff]
      %v1842 = vld [vmem:[#allocation3 + $0xf8] sm:$0xff]
      %v1843 = vld [vmem:[#allocation3 + $0x100] sm:$0xff]
      %v1844 = vld [vmem:[#allocation3 + $0x108] sm:$0xff]
      %v1845 = vld [vmem:[#allocation3 + $0x110] sm:$0xff]
      %v1846 = vld [vmem:[#allocation3 + $0x118] sm:$0xff]
      %v1847 = vld [vmem:[#allocation3 + $0x120] sm:$0xff]
      %v1848 = vld [vmem:[#allocation3 + $0x128] sm:$0xff]
      %v1849 = vld [vmem:[#allocation3 + $0x130] sm:$0xff]
      %v1850 = vld [vmem:[#allocation3 + $0x138] sm:$0xff]
      %v1851 = vld [vmem:[#allocation3 + $0x140] sm:$0xff]
      %v1852 = vld [vmem:[#allocation3 + $0x148] sm:$0xff]
      %v1853 = vld [vmem:[#allocation3 + $0x150] sm:$0xff]
      %v1854 = vld [vmem:[#allocation3 + $0x158] sm:$0xff]
      %v1855 = vld [vmem:[#allocation3 + $0x160] sm:$0xff]
      %v1856 = vld [vmem:[#allocation3 + $0x168] sm:$0xff]
      %v1857 = vld [vmem:[#allocation3 + $0x170] sm:$0xff]
      %v1858 = vld [vmem:[#allocation3 + $0x178] sm:$0xff]
      %v1859 = vld [vmem:[#allocation3 + $0x180] sm:$0xff]
      %v1860 = vld [vmem:[#allocation3 + $0x188] sm:$0xff]
      %v1861 = vld [vmem:[#allocation3 + $0x190] sm:$0xff]
      %v1862 = vld [vmem:[#allocation3 + $0x198] sm:$0xff]
      %v1863 = vld [vmem:[#allocation3 + $0x1a0] sm:$0xff]
      %v1864 = vld [vmem:[#allocation3 + $0x1a8] sm:$0xff]
      %v1865 = vld [vmem:[#allocation3 + $0x1b0] sm:$0xff]
      %v1866 = vld [vmem:[#allocation3 + $0x1b8] sm:$0xff]
      %v1867 = vld [vmem:[#allocation3 + $0x1c0] sm:$0xff]
      %v1868 = vld [vmem:[#allocation3 + $0x1c8] sm:$0xff]
      %v1869 = vld [vmem:[#allocation3 + $0x1d0] sm:$0xff]
      %v1870 = vld [vmem:[#allocation3 + $0x1d8] sm:$0xff]
      %v1871 = vld [vmem:[#allocation3 + $0x1e0] sm:$0xff]
      %v1872 = vld [vmem:[#allocation3 + $0x1e8] sm:$0xff]
      %v1873 = vld [vmem:[#allocation3 + $0x1f0] sm:$0xff]
      %v1874 = vld [vmem:[#allocation3 + $0x1f8] sm:$0xff]
      %v1875 = vld [vmem:[#allocation3 + $0x200] sm:$0xff]
      %v1876 = vld [vmem:[#allocation3 + $0x208] sm:$0xff]
      %v1877 = vld [vmem:[#allocation3 + $0x210] sm:$0xff]
      %v1878 = vld [vmem:[#allocation3 + $0x218] sm:$0xff]
      %v1879 = vld [vmem:[#allocation3 + $0x220] sm:$0xff]
      %v1880 = vld [vmem:[#allocation3 + $0x228] sm:$0xff]
      %v1881 = vld [vmem:[#allocation3 + $0x230] sm:$0xff]
      %v1882 = vld [vmem:[#allocation3 + $0x238] sm:$0xff]
      %v1883 = vld [vmem:[#allocation3 + $0x240] sm:$0xff]
      %v1884 = vld [vmem:[#allocation3 + $0x248] sm:$0xff]
      %v1885 = vld [vmem:[#allocation3 + $0x250] sm:$0xff]
      %v1886 = vld [vmem:[#allocation3 + $0x258] sm:$0xff]
      %v1887 = vld [vmem:[#allocation3 + $0x260] sm:$0xff]
      %v1888 = vld [vmem:[#allocation3 + $0x268] sm:$0xff]
      %v1889 = vld [vmem:[#allocation3 + $0x270] sm:$0xff]
      %v1890 = vld [vmem:[#allocation3 + $0x278] sm:$0xff]
      %v1891 = vld [vmem:[#allocation3 + $0x280] sm:$0xff]
      %v1892 = vld [vmem:[#allocation3 + $0x288] sm:$0xff]
      %v1893 = vld [vmem:[#allocation3 + $0x290] sm:$0xff]
      %v1894 = vld [vmem:[#allocation3 + $0x298] sm:$0xff]
      %v1895 = vld [vmem:[#allocation3 + $0x2a0] sm:$0xff]
      %v1896 = vld [vmem:[#allocation3 + $0x2a8] sm:$0xff]
      %v1897 = vld [vmem:[#allocation3 + $0x2b0] sm:$0xff]
      %v1898 = vld [vmem:[#allocation3 + $0x2b8] sm:$0xff]
      %v1899 = vld [vmem:[#allocation3 + $0x2c0] sm:$0xff]
      %v1900 = vld [vmem:[#allocation3 + $0x2c8] sm:$0xff]
      %v1901 = vld [vmem:[#allocation3 + $0x2d0] sm:$0xff]
      %v1902 = vld [vmem:[#allocation3 + $0x2d8] sm:$0xff]
      %v1903 = vld [vmem:[#allocation3 + $0x2e0] sm:$0xff]
      %v1904 = vld [vmem:[#allocation3 + $0x2e8] sm:$0xff]
      %v1905 = vld [vmem:[#allocation3 + $0x2f0] sm:$0xff]
      %v1906 = vld [vmem:[#allocation3 + $0x2f8] sm:$0xff]
      %v1907 = vld [vmem:[#allocation3 + $0x300] sm:$0xff]
      %v1908 = vld [vmem:[#allocation3 + $0x308] sm:$0xff]
      %v1909 = vld [vmem:[#allocation3 + $0x310] sm:$0xff]
      %v1910 = vld [vmem:[#allocation3 + $0x318] sm:$0xff]
      %v1911 = vld [vmem:[#allocation3 + $0x320] sm:$0xff]
      %v1912 = vld [vmem:[#allocation3 + $0x328] sm:$0xff]
      %v1913 = vld [vmem:[#allocation3 + $0x330] sm:$0xff]
      %v1914 = vld [vmem:[#allocation3 + $0x338] sm:$0xff]
      %v1915 = vld [vmem:[#allocation3 + $0x340] sm:$0xff]
      %v1916 = vld [vmem:[#allocation3 + $0x348] sm:$0xff]
      %v1917 = vld [vmem:[#allocation3 + $0x350] sm:$0xff]
      %v1918 = vld [vmem:[#allocation3 + $0x358] sm:$0xff]
      %v1919 = vld [vmem:[#allocation3 + $0x360] sm:$0xff]
      %v1920 = vld [vmem:[#allocation3 + $0x368] sm:$0xff]
      %v1921 = vld [vmem:[#allocation3 + $0x370] sm:$0xff]
      %v1922 = vld [vmem:[#allocation3 + $0x378] sm:$0xff]
      %v1923 = vld [vmem:[#allocation3 + $0x380] sm:$0xff]
      %v1924 = vld [vmem:[#allocation3 + $0x388] sm:$0xff]
      %v1925 = vld [vmem:[#allocation3 + $0x390] sm:$0xff]
      %v1926 = vld [vmem:[#allocation3 + $0x398] sm:$0xff]
      %v1927 = vld [vmem:[#allocation3 + $0x3a0] sm:$0xff]
      %v1928 = vld [vmem:[#allocation3 + $0x3a8] sm:$0xff]
      %v1929 = vld [vmem:[#allocation3 + $0x3b0] sm:$0xff]
      %v1930 = vld [vmem:[#allocation3 + $0x3b8] sm:$0xff]
      %v1931 = vld [vmem:[#allocation3 + $0x3c0] sm:$0xff]
      %v1932 = vld [vmem:[#allocation3 + $0x3c8] sm:$0xff]
      %v1933 = vld [vmem:[#allocation3 + $0x3d0] sm:$0xff]
      %v1934 = vld [vmem:[#allocation3 + $0x3d8] sm:$0xff]
      %v1935 = vld [vmem:[#allocation3 + $0x3e0] sm:$0xff]
      %v1936 = vld [vmem:[#allocation3 + $0x3e8] sm:$0xff]
      %v1937 = vld [vmem:[#allocation3 + $0x3f0] sm:$0xff]
      %v1938 = vld [vmem:[#allocation3 + $0x3f8] sm:$0xff]
      %v1939 = vld [vmem:[%s4] sm:$0xf]
      %v1941 = vlaneseq
      %v1942 = vshrl.u32 %v1941, 7
      %v1943 = vsub.s32 0, %v1942
      %v1944 = vrot.slane %v1939, %v1943
      %v1945 = vlaneseq
      %v1946 = vshrl.u32 %v1945, 7
      %v1947 = vsub.s32 1, %v1946
      %v1948 = vrot.slane %v1939, %v1947
      %v1949 = vlaneseq
      %v1950 = vshrl.u32 %v1949, 7
      %v1951 = vsub.s32 2, %v1950
      %v1952 = vrot.slane %v1939, %v1951
      %v1953 = vlaneseq
      %v1954 = vshrl.u32 %v1953, 7
      %v1955 = vsub.s32 3, %v1954
      %v1956 = vrot.slane %v1939, %v1955
      %v2089 = vunpack.c.l.b16 %v1811
      %v2090 = vunpack.c.h.b16 %v1811
      %v2091 = vunpack.c.l.b16 %v1812
      %v2092 = vunpack.c.h.b16 %v1812
      %v2093 = vunpack.c.l.b16 %v1813
      %v2094 = vunpack.c.h.b16 %v1813
      %v2095 = vunpack.c.l.b16 %v1814
      %v2096 = vunpack.c.h.b16 %v1814
      %v2097 = vunpack.c.l.b16 %v1815
      %v2098 = vunpack.c.h.b16 %v1815
      %v2099 = vunpack.c.l.b16 %v1816
      %v2100 = vunpack.c.h.b16 %v1816
      %v2101 = vunpack.c.l.b16 %v1817
      %v2102 = vunpack.c.h.b16 %v1817
      %v2103 = vunpack.c.l.b16 %v1818
      %v2104 = vunpack.c.h.b16 %v1818
      %v2105 = vunpack.c.l.b16 %v1819
      %v2106 = vunpack.c.h.b16 %v1819
      %v2107 = vunpack.c.l.b16 %v1820
      %v2108 = vunpack.c.h.b16 %v1820
      %v2109 = vunpack.c.l.b16 %v1821
      %v2110 = vunpack.c.h.b16 %v1821
      %v2111 = vunpack.c.l.b16 %v1822
      %v2112 = vunpack.c.h.b16 %v1822
      %v2113 = vunpack.c.l.b16 %v1823
      %v2114 = vunpack.c.h.b16 %v1823
      %v2115 = vunpack.c.l.b16 %v1824
      %v2116 = vunpack.c.h.b16 %v1824
      %v2117 = vunpack.c.l.b16 %v1825
      %v2118 = vunpack.c.h.b16 %v1825
      %v2119 = vunpack.c.l.b16 %v1826
      %v2120 = vunpack.c.h.b16 %v1826
      %v2121 = vunpack.c.l.b16 %v1827
      %v2122 = vunpack.c.h.b16 %v1827
      %v2123 = vunpack.c.l.b16 %v1828
      %v2124 = vunpack.c.h.b16 %v1828
      %v2125 = vunpack.c.l.b16 %v1829
      %v2126 = vunpack.c.h.b16 %v1829
      %v2127 = vunpack.c.l.b16 %v1830
      %v2128 = vunpack.c.h.b16 %v1830
      %v2129 = vunpack.c.l.b16 %v1831
      %v2130 = vunpack.c.h.b16 %v1831
      %v2131 = vunpack.c.l.b16 %v1832
      %v2132 = vunpack.c.h.b16 %v1832
      %v2133 = vunpack.c.l.b16 %v1833
      %v2134 = vunpack.c.h.b16 %v1833
      %v2135 = vunpack.c.l.b16 %v1834
      %v2136 = vunpack.c.h.b16 %v1834
      %v2137 = vunpack.c.l.b16 %v1835
      %v2138 = vunpack.c.h.b16 %v1835
      %v2139 = vunpack.c.l.b16 %v1836
      %v2140 = vunpack.c.h.b16 %v1836
      %v2141 = vunpack.c.l.b16 %v1837
      %v2142 = vunpack.c.h.b16 %v1837
      %v2143 = vunpack.c.l.b16 %v1838
      %v2144 = vunpack.c.h.b16 %v1838
      %v2145 = vunpack.c.l.b16 %v1839
      %v2146 = vunpack.c.h.b16 %v1839
      %v2147 = vunpack.c.l.b16 %v1840
      %v2148 = vunpack.c.h.b16 %v1840
      %v2149 = vunpack.c.l.b16 %v1841
      %v2150 = vunpack.c.h.b16 %v1841
      %v2151 = vunpack.c.l.b16 %v1842
      %v2152 = vunpack.c.h.b16 %v1842
      %v2153 = vunpack.c.l.b16 %v1843
      %v2154 = vunpack.c.h.b16 %v1843
      %v2155 = vunpack.c.l.b16 %v1844
      %v2156 = vunpack.c.h.b16 %v1844
      %v2157 = vunpack.c.l.b16 %v1845
      %v2158 = vunpack.c.h.b16 %v1845
      %v2159 = vunpack.c.l.b16 %v1846
      %v2160 = vunpack.c.h.b16 %v1846
      %v2161 = vunpack.c.l.b16 %v1847
      %v2162 = vunpack.c.h.b16 %v1847
      %v2163 = vunpack.c.l.b16 %v1848
      %v2164 = vunpack.c.h.b16 %v1848
      %v2165 = vunpack.c.l.b16 %v1849
      %v2166 = vunpack.c.h.b16 %v1849
      %v2167 = vunpack.c.l.b16 %v1850
      %v2168 = vunpack.c.h.b16 %v1850
      %v2169 = vunpack.c.l.b16 %v1851
      %v2170 = vunpack.c.h.b16 %v1851
      %v2171 = vunpack.c.l.b16 %v1852
      %v2172 = vunpack.c.h.b16 %v1852
      %v2173 = vunpack.c.l.b16 %v1853
      %v2174 = vunpack.c.h.b16 %v1853
      %v2175 = vunpack.c.l.b16 %v1854
      %v2176 = vunpack.c.h.b16 %v1854
      %v2177 = vunpack.c.l.b16 %v1855
      %v2178 = vunpack.c.h.b16 %v1855
      %v2179 = vunpack.c.l.b16 %v1856
      %v2180 = vunpack.c.h.b16 %v1856
      %v2181 = vunpack.c.l.b16 %v1857
      %v2182 = vunpack.c.h.b16 %v1857
      %v2183 = vunpack.c.l.b16 %v1858
      %v2184 = vunpack.c.h.b16 %v1858
      %v2185 = vunpack.c.l.b16 %v1859
      %v2186 = vunpack.c.h.b16 %v1859
      %v2187 = vunpack.c.l.b16 %v1860
      %v2188 = vunpack.c.h.b16 %v1860
      %v2189 = vunpack.c.l.b16 %v1861
      %v2190 = vunpack.c.h.b16 %v1861
      %v2191 = vunpack.c.l.b16 %v1862
      %v2192 = vunpack.c.h.b16 %v1862
      %v2193 = vunpack.c.l.b16 %v1863
      %v2194 = vunpack.c.h.b16 %v1863
      %v2195 = vunpack.c.l.b16 %v1864
      %v2196 = vunpack.c.h.b16 %v1864
      %v2197 = vunpack.c.l.b16 %v1865
      %v2198 = vunpack.c.h.b16 %v1865
      %v2199 = vunpack.c.l.b16 %v1866
      %v2200 = vunpack.c.h.b16 %v1866
      %v2201 = vunpack.c.l.b16 %v1867
      %v2202 = vunpack.c.h.b16 %v1867
      %v2203 = vunpack.c.l.b16 %v1868
      %v2204 = vunpack.c.h.b16 %v1868
      %v2205 = vunpack.c.l.b16 %v1869
      %v2206 = vunpack.c.h.b16 %v1869
      %v2207 = vunpack.c.l.b16 %v1870
      %v2208 = vunpack.c.h.b16 %v1870
      %v2209 = vunpack.c.l.b16 %v1871
      %v2210 = vunpack.c.h.b16 %v1871
      %v2211 = vunpack.c.l.b16 %v1872
      %v2212 = vunpack.c.h.b16 %v1872
      %v2213 = vunpack.c.l.b16 %v1873
      %v2214 = vunpack.c.h.b16 %v1873
      %v2215 = vunpack.c.l.b16 %v1874
      %v2216 = vunpack.c.h.b16 %v1874
      %v2217 = vunpack.c.l.b16 %v1875
      %v2218 = vunpack.c.h.b16 %v1875
      %v2219 = vunpack.c.l.b16 %v1876
      %v2220 = vunpack.c.h.b16 %v1876
      %v2221 = vunpack.c.l.b16 %v1877
      %v2222 = vunpack.c.h.b16 %v1877
      %v2223 = vunpack.c.l.b16 %v1878
      %v2224 = vunpack.c.h.b16 %v1878
      %v2225 = vunpack.c.l.b16 %v1879
      %v2226 = vunpack.c.h.b16 %v1879
      %v2227 = vunpack.c.l.b16 %v1880
      %v2228 = vunpack.c.h.b16 %v1880
      %v2229 = vunpack.c.l.b16 %v1881
      %v2230 = vunpack.c.h.b16 %v1881
      %v2231 = vunpack.c.l.b16 %v1882
      %v2232 = vunpack.c.h.b16 %v1882
      %v2233 = vunpack.c.l.b16 %v1883
      %v2234 = vunpack.c.h.b16 %v1883
      %v2235 = vunpack.c.l.b16 %v1884
      %v2236 = vunpack.c.h.b16 %v1884
      %v2237 = vunpack.c.l.b16 %v1885
      %v2238 = vunpack.c.h.b16 %v1885
      %v2239 = vunpack.c.l.b16 %v1886
      %v2240 = vunpack.c.h.b16 %v1886
      %v2241 = vunpack.c.l.b16 %v1887
      %v2242 = vunpack.c.h.b16 %v1887
      %v2243 = vunpack.c.l.b16 %v1888
      %v2244 = vunpack.c.h.b16 %v1888
      %v2245 = vunpack.c.l.b16 %v1889
      %v2246 = vunpack.c.h.b16 %v1889
      %v2247 = vunpack.c.l.b16 %v1890
      %v2248 = vunpack.c.h.b16 %v1890
      %v2249 = vunpack.c.l.b16 %v1891
      %v2250 = vunpack.c.h.b16 %v1891
      %v2251 = vunpack.c.l.b16 %v1892
      %v2252 = vunpack.c.h.b16 %v1892
      %v2253 = vunpack.c.l.b16 %v1893
      %v2254 = vunpack.c.h.b16 %v1893
      %v2255 = vunpack.c.l.b16 %v1894
      %v2256 = vunpack.c.h.b16 %v1894
      %v2257 = vunpack.c.l.b16 %v1895
      %v2258 = vunpack.c.h.b16 %v1895
      %v2259 = vunpack.c.l.b16 %v1896
      %v2260 = vunpack.c.h.b16 %v1896
      %v2261 = vunpack.c.l.b16 %v1897
      %v2262 = vunpack.c.h.b16 %v1897
      %v2263 = vunpack.c.l.b16 %v1898
      %v2264 = vunpack.c.h.b16 %v1898
      %v2265 = vunpack.c.l.b16 %v1899
      %v2266 = vunpack.c.h.b16 %v1899
      %v2267 = vunpack.c.l.b16 %v1900
      %v2268 = vunpack.c.h.b16 %v1900
      %v2269 = vunpack.c.l.b16 %v1901
      %v2270 = vunpack.c.h.b16 %v1901
      %v2271 = vunpack.c.l.b16 %v1902
      %v2272 = vunpack.c.h.b16 %v1902
      %v2273 = vunpack.c.l.b16 %v1903
      %v2274 = vunpack.c.h.b16 %v1903
      %v2275 = vunpack.c.l.b16 %v1904
      %v2276 = vunpack.c.h.b16 %v1904
      %v2277 = vunpack.c.l.b16 %v1905
      %v2278 = vunpack.c.h.b16 %v1905
      %v2279 = vunpack.c.l.b16 %v1906
      %v2280 = vunpack.c.h.b16 %v1906
      %v2281 = vunpack.c.l.b16 %v1907
      %v2282 = vunpack.c.h.b16 %v1907
      %v2283 = vunpack.c.l.b16 %v1908
      %v2284 = vunpack.c.h.b16 %v1908
      %v2285 = vunpack.c.l.b16 %v1909
      %v2286 = vunpack.c.h.b16 %v1909
      %v2287 = vunpack.c.l.b16 %v1910
      %v2288 = vunpack.c.h.b16 %v1910
      %v2289 = vunpack.c.l.b16 %v1911
      %v2290 = vunpack.c.h.b16 %v1911
      %v2291 = vunpack.c.l.b16 %v1912
      %v2292 = vunpack.c.h.b16 %v1912
      %v2293 = vunpack.c.l.b16 %v1913
      %v2294 = vunpack.c.h.b16 %v1913
      %v2295 = vunpack.c.l.b16 %v1914
      %v2296 = vunpack.c.h.b16 %v1914
      %v2297 = vunpack.c.l.b16 %v1915
      %v2298 = vunpack.c.h.b16 %v1915
      %v2299 = vunpack.c.l.b16 %v1916
      %v2300 = vunpack.c.h.b16 %v1916
      %v2301 = vunpack.c.l.b16 %v1917
      %v2302 = vunpack.c.h.b16 %v1917
      %v2303 = vunpack.c.l.b16 %v1918
      %v2304 = vunpack.c.h.b16 %v1918
      %v2305 = vunpack.c.l.b16 %v1919
      %v2306 = vunpack.c.h.b16 %v1919
      %v2307 = vunpack.c.l.b16 %v1920
      %v2308 = vunpack.c.h.b16 %v1920
      %v2309 = vunpack.c.l.b16 %v1921
      %v2310 = vunpack.c.h.b16 %v1921
      %v2311 = vunpack.c.l.b16 %v1922
      %v2312 = vunpack.c.h.b16 %v1922
      %v2313 = vunpack.c.l.b16 %v1923
      %v2314 = vunpack.c.h.b16 %v1923
      %v2315 = vunpack.c.l.b16 %v1924
      %v2316 = vunpack.c.h.b16 %v1924
      %v2317 = vunpack.c.l.b16 %v1925
      %v2318 = vunpack.c.h.b16 %v1925
      %v2319 = vunpack.c.l.b16 %v1926
      %v2320 = vunpack.c.h.b16 %v1926
      %v2321 = vunpack.c.l.b16 %v1927
      %v2322 = vunpack.c.h.b16 %v1927
      %v2323 = vunpack.c.l.b16 %v1928
      %v2324 = vunpack.c.h.b16 %v1928
      %v2325 = vunpack.c.l.b16 %v1929
      %v2326 = vunpack.c.h.b16 %v1929
      %v2327 = vunpack.c.l.b16 %v1930
      %v2328 = vunpack.c.h.b16 %v1930
      %v2329 = vunpack.c.l.b16 %v1931
      %v2330 = vunpack.c.h.b16 %v1931
      %v2331 = vunpack.c.l.b16 %v1932
      %v2332 = vunpack.c.h.b16 %v1932
      %v2333 = vunpack.c.l.b16 %v1933
      %v2334 = vunpack.c.h.b16 %v1933
      %v2335 = vunpack.c.l.b16 %v1934
      %v2336 = vunpack.c.h.b16 %v1934
      %v2337 = vunpack.c.l.b16 %v1935
      %v2338 = vunpack.c.h.b16 %v1935
      %v2339 = vunpack.c.l.b16 %v1936
      %v2340 = vunpack.c.h.b16 %v1936
      %v2341 = vunpack.c.l.b16 %v1937
      %v2342 = vunpack.c.h.b16 %v1937
      %v2343 = vunpack.c.l.b16 %v1938
      %v2344 = vunpack.c.h.b16 %v1938
      %v2345 = vpack.c.b16 %v2093, %v2089
      %v2346 = vpack.c.b16 %v2094, %v2090
      %v2347 = vpack.c.b16 %v2095, %v2091
      %v2348 = vpack.c.b16 %v2096, %v2092
      %v2349 = vpack.c.b16 %v2101, %v2097
      %v2350 = vpack.c.b16 %v2102, %v2098
      %v2351 = vpack.c.b16 %v2103, %v2099
      %v2352 = vpack.c.b16 %v2104, %v2100
      %v2353 = vpack.c.b16 %v2109, %v2105
      %v2354 = vpack.c.b16 %v2110, %v2106
      %v2355 = vpack.c.b16 %v2111, %v2107
      %v2356 = vpack.c.b16 %v2112, %v2108
      %v2357 = vpack.c.b16 %v2117, %v2113
      %v2358 = vpack.c.b16 %v2118, %v2114
      %v2359 = vpack.c.b16 %v2119, %v2115
      %v2360 = vpack.c.b16 %v2120, %v2116
      %v2361 = vpack.c.b16 %v2125, %v2121
      %v2362 = vpack.c.b16 %v2126, %v2122
      %v2363 = vpack.c.b16 %v2127, %v2123
      %v2364 = vpack.c.b16 %v2128, %v2124
      %v2365 = vpack.c.b16 %v2133, %v2129
      %v2366 = vpack.c.b16 %v2134, %v2130
      %v2367 = vpack.c.b16 %v2135, %v2131
      %v2368 = vpack.c.b16 %v2136, %v2132
      %v2369 = vpack.c.b16 %v2141, %v2137
      %v2370 = vpack.c.b16 %v2142, %v2138
      %v2371 = vpack.c.b16 %v2143, %v2139
      %v2372 = vpack.c.b16 %v2144, %v2140
      %v2373 = vpack.c.b16 %v2149, %v2145
      %v2374 = vpack.c.b16 %v2150, %v2146
      %v2375 = vpack.c.b16 %v2151, %v2147
      %v2376 = vpack.c.b16 %v2152, %v2148
      %v2377 = vpack.c.b16 %v2157, %v2153
      %v2378 = vpack.c.b16 %v2158, %v2154
      %v2379 = vpack.c.b16 %v2159, %v2155
      %v2380 = vpack.c.b16 %v2160, %v2156
      %v2381 = vpack.c.b16 %v2165, %v2161
      %v2382 = vpack.c.b16 %v2166, %v2162
      %v2383 = vpack.c.b16 %v2167, %v2163
      %v2384 = vpack.c.b16 %v2168, %v2164
      %v2385 = vpack.c.b16 %v2173, %v2169
      %v2386 = vpack.c.b16 %v2174, %v2170
      %v2387 = vpack.c.b16 %v2175, %v2171
      %v2388 = vpack.c.b16 %v2176, %v2172
      %v2389 = vpack.c.b16 %v2181, %v2177
      %v2390 = vpack.c.b16 %v2182, %v2178
      %v2391 = vpack.c.b16 %v2183, %v2179
      %v2392 = vpack.c.b16 %v2184, %v2180
      %v2393 = vpack.c.b16 %v2189, %v2185
      %v2394 = vpack.c.b16 %v2190, %v2186
      %v2395 = vpack.c.b16 %v2191, %v2187
      %v2396 = vpack.c.b16 %v2192, %v2188
      %v2397 = vpack.c.b16 %v2197, %v2193
      %v2398 = vpack.c.b16 %v2198, %v2194
      %v2399 = vpack.c.b16 %v2199, %v2195
      %v2400 = vpack.c.b16 %v2200, %v2196
      %v2401 = vpack.c.b16 %v2205, %v2201
      %v2402 = vpack.c.b16 %v2206, %v2202
      %v2403 = vpack.c.b16 %v2207, %v2203
      %v2404 = vpack.c.b16 %v2208, %v2204
      %v2405 = vpack.c.b16 %v2213, %v2209
      %v2406 = vpack.c.b16 %v2214, %v2210
      %v2407 = vpack.c.b16 %v2215, %v2211
      %v2408 = vpack.c.b16 %v2216, %v2212
      %v2409 = vpack.c.b16 %v2221, %v2217
      %v2410 = vpack.c.b16 %v2222, %v2218
      %v2411 = vpack.c.b16 %v2223, %v2219
      %v2412 = vpack.c.b16 %v2224, %v2220
      %v2413 = vpack.c.b16 %v2229, %v2225
      %v2414 = vpack.c.b16 %v2230, %v2226
      %v2415 = vpack.c.b16 %v2231, %v2227
      %v2416 = vpack.c.b16 %v2232, %v2228
      %v2417 = vpack.c.b16 %v2237, %v2233
      %v2418 = vpack.c.b16 %v2238, %v2234
      %v2419 = vpack.c.b16 %v2239, %v2235
      %v2420 = vpack.c.b16 %v2240, %v2236
      %v2421 = vpack.c.b16 %v2245, %v2241
      %v2422 = vpack.c.b16 %v2246, %v2242
      %v2423 = vpack.c.b16 %v2247, %v2243
      %v2424 = vpack.c.b16 %v2248, %v2244
      %v2425 = vpack.c.b16 %v2253, %v2249
      %v2426 = vpack.c.b16 %v2254, %v2250
      %v2427 = vpack.c.b16 %v2255, %v2251
      %v2428 = vpack.c.b16 %v2256, %v2252
      %v2429 = vpack.c.b16 %v2261, %v2257
      %v2430 = vpack.c.b16 %v2262, %v2258
      %v2431 = vpack.c.b16 %v2263, %v2259
      %v2432 = vpack.c.b16 %v2264, %v2260
      %v2433 = vpack.c.b16 %v2269, %v2265
      %v2434 = vpack.c.b16 %v2270, %v2266
      %v2435 = vpack.c.b16 %v2271, %v2267
      %v2436 = vpack.c.b16 %v2272, %v2268
      %v2437 = vpack.c.b16 %v2277, %v2273
      %v2438 = vpack.c.b16 %v2278, %v2274
      %v2439 = vpack.c.b16 %v2279, %v2275
      %v2440 = vpack.c.b16 %v2280, %v2276
      %v2441 = vpack.c.b16 %v2285, %v2281
      %v2442 = vpack.c.b16 %v2286, %v2282
      %v2443 = vpack.c.b16 %v2287, %v2283
      %v2444 = vpack.c.b16 %v2288, %v2284
      %v2445 = vpack.c.b16 %v2293, %v2289
      %v2446 = vpack.c.b16 %v2294, %v2290
      %v2447 = vpack.c.b16 %v2295, %v2291
      %v2448 = vpack.c.b16 %v2296, %v2292
      %v2449 = vpack.c.b16 %v2301, %v2297
      %v2450 = vpack.c.b16 %v2302, %v2298
      %v2451 = vpack.c.b16 %v2303, %v2299
      %v2452 = vpack.c.b16 %v2304, %v2300
      %v2453 = vpack.c.b16 %v2309, %v2305
      %v2454 = vpack.c.b16 %v2310, %v2306
      %v2455 = vpack.c.b16 %v2311, %v2307
      %v2456 = vpack.c.b16 %v2312, %v2308
      %v2457 = vpack.c.b16 %v2317, %v2313
      %v2458 = vpack.c.b16 %v2318, %v2314
      %v2459 = vpack.c.b16 %v2319, %v2315
      %v2460 = vpack.c.b16 %v2320, %v2316
      %v2461 = vpack.c.b16 %v2325, %v2321
      %v2462 = vpack.c.b16 %v2326, %v2322
      %v2463 = vpack.c.b16 %v2327, %v2323
      %v2464 = vpack.c.b16 %v2328, %v2324
      %v2465 = vpack.c.b16 %v2333, %v2329
      %v2466 = vpack.c.b16 %v2334, %v2330
      %v2467 = vpack.c.b16 %v2335, %v2331
      %v2468 = vpack.c.b16 %v2336, %v2332
      %v2469 = vpack.c.b16 %v2341, %v2337
      %v2470 = vpack.c.b16 %v2342, %v2338
      %v2471 = vpack.c.b16 %v2343, %v2339
      %v2472 = vpack.c.b16 %v2344, %v2340
      %2601 = vmatprep.subr.bf16.mxu0 %v2346
      %2602 = vmatpush1.bf16.msra.mxu0 %v2345
      %2603 = vmatprep.subr.bf16.mxu0 %v2350
      %2604 = vmatpush1.bf16.msra.mxu0 %v2349
      %2605 = vmatprep.subr.bf16.mxu0 %v2354
      %2606 = vmatpush1.bf16.msra.mxu0 %v2353
      %2607 = vmatprep.subr.bf16.mxu0 %v2358
      %2608 = vmatpush1.bf16.msra.mxu0 %v2357
      %2609 = vmatprep.subr.bf16.mxu0 %v2362
      %2610 = vmatpush1.bf16.msra.mxu0 %v2361
      %2611 = vmatprep.subr.bf16.mxu0 %v2366
      %2612 = vmatpush1.bf16.msra.mxu0 %v2365
      %2613 = vmatprep.subr.bf16.mxu0 %v2370
      %2614 = vmatpush1.bf16.msra.mxu0 %v2369
      %2615 = vmatprep.subr.bf16.mxu0 %v2374
      %2616 = vmatpush1.bf16.msra.mxu0 %v2373
      %2617 = vmatprep.subr.bf16.mxu0 %v2378
      %2618 = vmatpush1.bf16.msra.mxu0 %v2377
      %2619 = vmatprep.subr.bf16.mxu0 %v2382
      %2620 = vmatpush1.bf16.msra.mxu0 %v2381
      %2621 = vmatprep.subr.bf16.mxu0 %v2386
      %2622 = vmatpush1.bf16.msra.mxu0 %v2385
      %2623 = vmatprep.subr.bf16.mxu0 %v2390
      %2624 = vmatpush1.bf16.msra.mxu0 %v2389
      %2625 = vmatprep.subr.bf16.mxu0 %v2394
      %2626 = vmatpush1.bf16.msra.mxu0 %v2393
      %2627 = vmatprep.subr.bf16.mxu0 %v2398
      %2628 = vmatpush1.bf16.msra.mxu0 %v2397
      %2629 = vmatprep.subr.bf16.mxu0 %v2402
      %2630 = vmatpush1.bf16.msra.mxu0 %v2401
      %2631 = vmatprep.subr.bf16.mxu0 %v2406
      %2632 = vmatpush1.bf16.msra.mxu0 %v2405
      %2633 = vmatprep.mubr.bf16.mxu0 %v1808
      %2634 = vmatmul.mubr.bf16.gmra.mrb[0].mxu0 %v1807
      %v2635 = vpop.f32.mrb[0].mxu0
      %v2636 = vadd.f32 %v1944, %v2635
      %v2637 = vpop.f32.mrb[0].mxu0
      %v2638 = vadd.f32 %v1948, %v2637
      %v2639 = vpop.f32.mrb[0].mxu0
      %v2640 = vpop.f32.mrb[0].mxu0
      %2641 = vdwg.mxu0
      %2642 = vmatprep.subr.bf16.mxu0 %v2410
      %2643 = vmatpush1.bf16.msra.mxu0 %v2409
      %2644 = vmatprep.subr.bf16.mxu0 %v2414
      %2645 = vmatpush1.bf16.msra.mxu0 %v2413
      %2646 = vmatprep.subr.bf16.mxu0 %v2418
      %2647 = vmatpush1.bf16.msra.mxu0 %v2417
      %2648 = vmatprep.subr.bf16.mxu0 %v2422
      %2649 = vmatpush1.bf16.msra.mxu0 %v2421
      %2650 = vmatprep.subr.bf16.mxu0 %v2426
      %2651 = vmatpush1.bf16.msra.mxu0 %v2425
      %2652 = vmatprep.subr.bf16.mxu0 %v2430
      %2653 = vmatpush1.bf16.msra.mxu0 %v2429
      %2654 = vmatprep.subr.bf16.mxu0 %v2434
      %2655 = vmatpush1.bf16.msra.mxu0 %v2433
      %2656 = vmatprep.subr.bf16.mxu0 %v2438
      %2657 = vmatpush1.bf16.msra.mxu0 %v2437
      %2658 = vmatprep.subr.bf16.mxu0 %v2442
      %2659 = vmatpush1.bf16.msra.mxu0 %v2441
      %2660 = vmatprep.subr.bf16.mxu0 %v2446
      %2661 = vmatpush1.bf16.msra.mxu0 %v2445
      %2662 = vmatprep.subr.bf16.mxu0 %v2450
      %2663 = vmatpush1.bf16.msra.mxu0 %v2449
      %2664 = vmatprep.subr.bf16.mxu0 %v2454
      %2665 = vmatpush1.bf16.msra.mxu0 %v2453
      %2666 = vmatprep.subr.bf16.mxu0 %v2458
      %2667 = vmatpush1.bf16.msra.mxu0 %v2457
      %2668 = vmatprep.subr.bf16.mxu0 %v2462
      %2669 = vmatpush1.bf16.msra.mxu0 %v2461
      %2670 = vmatprep.subr.bf16.mxu0 %v2466
      %2671 = vmatpush1.bf16.msra.mxu0 %v2465
      %2672 = vmatprep.subr.bf16.mxu0 %v2470
      %2673 = vmatpush1.bf16.msra.mxu0 %v2469
      %2674 = vmatprep.mubr.bf16.mxu0 %v1810
      %2675 = vmatmul.mubr.bf16.gmra.mrb[0].mxu0 %v1809
      %v2676 = vpop.f32.mrb[0].mxu0
      %v2677 = vadd.f32 %v2636, %v2676
      %v2678 = vpop.f32.mrb[0].mxu0
      %v2679 = vadd.f32 %v2638, %v2678
      %v2680 = vpop.f32.mrb[0].mxu0
      %v2681 = vpop.f32.mrb[0].mxu0
      %2682 = vdwg.mxu0
      %2683 = vmatprep.subr.bf16.mxu0 %v2348
      %2684 = vmatpush1.bf16.msra.mxu0 %v2347
      %2685 = vmatprep.subr.bf16.mxu0 %v2352
      %2686 = vmatpush1.bf16.msra.mxu0 %v2351
      %2687 = vmatprep.subr.bf16.mxu0 %v2356
      %2688 = vmatpush1.bf16.msra.mxu0 %v2355
      %2689 = vmatprep.subr.bf16.mxu0 %v2360
      %2690 = vmatpush1.bf16.msra.mxu0 %v2359
      %2691 = vmatprep.subr.bf16.mxu0 %v2364
      %2692 = vmatpush1.bf16.msra.mxu0 %v2363
      %2693 = vmatprep.subr.bf16.mxu0 %v2368
      %2694 = vmatpush1.bf16.msra.mxu0 %v2367
      %2695 = vmatprep.subr.bf16.mxu0 %v2372
      %2696 = vmatpush1.bf16.msra.mxu0 %v2371
      %2697 = vmatprep.subr.bf16.mxu0 %v2376
      %2698 = vmatpush1.bf16.msra.mxu0 %v2375
      %2699 = vmatprep.subr.bf16.mxu0 %v2380
      %2700 = vmatpush1.bf16.msra.mxu0 %v2379
      %2701 = vmatprep.subr.bf16.mxu0 %v2384
      %2702 = vmatpush1.bf16.msra.mxu0 %v2383
      %2703 = vmatprep.subr.bf16.mxu0 %v2388
      %2704 = vmatpush1.bf16.msra.mxu0 %v2387
      %2705 = vmatprep.subr.bf16.mxu0 %v2392
      %2706 = vmatpush1.bf16.msra.mxu0 %v2391
      %2707 = vmatprep.subr.bf16.mxu0 %v2396
      %2708 = vmatpush1.bf16.msra.mxu0 %v2395
      %2709 = vmatprep.subr.bf16.mxu0 %v2400
      %2710 = vmatpush1.bf16.msra.mxu0 %v2399
      %2711 = vmatprep.subr.bf16.mxu0 %v2404
      %2712 = vmatpush1.bf16.msra.mxu0 %v2403
      %2713 = vmatprep.subr.bf16.mxu0 %v2408
      %2714 = vmatpush1.bf16.msra.mxu0 %v2407
      %2715 = vmatprep.mubr.bf16.mxu0 %v1808
      %2716 = vmatmul.mubr.bf16.gmra.mrb[0].mxu0 %v1807
      %v2717 = vpop.f32.mrb[0].mxu0
      %v2718 = vadd.f32 %v1952, %v2717
      %v2719 = vpop.f32.mrb[0].mxu0
      %v2720 = vadd.f32 %v1956, %v2719
      %v2721 = vpop.f32.mrb[0].mxu0
      %v2722 = vpop.f32.mrb[0].mxu0
      %2723 = vdwg.mxu0
      %2724 = vmatprep.subr.bf16.mxu0 %v2412
      %2725 = vmatpush1.bf16.msra.mxu0 %v2411
      %2726 = vmatprep.subr.bf16.mxu0 %v2416
      %2727 = vmatpush1.bf16.msra.mxu0 %v2415
      %2728 = vmatprep.subr.bf16.mxu0 %v2420
      %2729 = vmatpush1.bf16.msra.mxu0 %v2419
      %2730 = vmatprep.subr.bf16.mxu0 %v2424
      %2731 = vmatpush1.bf16.msra.mxu0 %v2423
      %2732 = vmatprep.subr.bf16.mxu0 %v2428
      %2733 = vmatpush1.bf16.msra.mxu0 %v2427
      %2734 = vmatprep.subr.bf16.mxu0 %v2432
      %2735 = vmatpush1.bf16.msra.mxu0 %v2431
      %2736 = vmatprep.subr.bf16.mxu0 %v2436
      %2737 = vmatpush1.bf16.msra.mxu0 %v2435
      %2738 = vmatprep.subr.bf16.mxu0 %v2440
      %2739 = vmatpush1.bf16.msra.mxu0 %v2439
      %2740 = vmatprep.subr.bf16.mxu0 %v2444
      %2741 = vmatpush1.bf16.msra.mxu0 %v2443
      %2742 = vmatprep.subr.bf16.mxu0 %v2448
      %2743 = vmatpush1.bf16.msra.mxu0 %v2447
      %2744 = vmatprep.subr.bf16.mxu0 %v2452
      %2745 = vmatpush1.bf16.msra.mxu0 %v2451
      %2746 = vmatprep.subr.bf16.mxu0 %v2456
      %2747 = vmatpush1.bf16.msra.mxu0 %v2455
      %2748 = vmatprep.subr.bf16.mxu0 %v2460
      %2749 = vmatpush1.bf16.msra.mxu0 %v2459
      %2750 = vmatprep.subr.bf16.mxu0 %v2464
      %2751 = vmatpush1.bf16.msra.mxu0 %v2463
      %2752 = vmatprep.subr.bf16.mxu0 %v2468
      %2753 = vmatpush1.bf16.msra.mxu0 %v2467
      %2754 = vmatprep.subr.bf16.mxu0 %v2472
      %2755 = vmatpush1.bf16.msra.mxu0 %v2471
      %2756 = vmatprep.mubr.bf16.mxu0 %v1810
      %2757 = vmatmul.mubr.bf16.gmra.mrb[0].mxu0 %v1809
      %v2758 = vpop.f32.mrb[0].mxu0
      %v2759 = vadd.f32 %v2718, %v2758
      %v2760 = vpop.f32.mrb[0].mxu0
      %v2761 = vadd.f32 %v2720, %v2760
      %v2762 = vpop.f32.mrb[0].mxu0
      %v2763 = vpop.f32.mrb[0].mxu0
      %2764 = vdwg.mxu0
      %v2765 = vmax.f32 %v2677, 0.0
      %v2766 = vmax.f32 %v2679, 0.0
      %v2767 = vmax.f32 %v2759, 0.0
      %v2768 = vmax.f32 %v2761, 0.0
      %v2769 = vpack.c.bf16 %v2765, %v2765
      %v2770 = vpack.c.bf16 %v2766, %v2766
      %v2771 = vpack.c.bf16 %v2767, %v2767
      %v2772 = vpack.c.bf16 %v2768, %v2768
      %v2773 = vld [vmem:[%s5] sm:$0xf]
      %v2774 = vld [vmem:[%s5 + $0x4] sm:$0xf]
      %v2775 = vld [vmem:[%s5 + $0x8] sm:$0xf]
      %v2776 = vld [vmem:[%s5 + $0xc] sm:$0xf]
      %v2777 = vld [vmem:[%s5 + $0x10] sm:$0xf]
      %v2778 = vld [vmem:[%s5 + $0x14] sm:$0xf]
      %v2779 = vld [vmem:[%s5 + $0x18] sm:$0xf]
      %v2780 = vld [vmem:[%s5 + $0x1c] sm:$0xf]
      %v2781 = vld [vmem:[%s5 + $0x20] sm:$0xf]
      %v2782 = vld [vmem:[%s5 + $0x24] sm:$0xf]
      %v2783 = vld [vmem:[%s5 + $0x28] sm:$0xf]
      %v2784 = vld [vmem:[%s5 + $0x2c] sm:$0xf]
      %v2785 = vld [vmem:[%s5 + $0x30] sm:$0xf]
      %v2786 = vld [vmem:[%s5 + $0x34] sm:$0xf]
      %v2787 = vld [vmem:[%s5 + $0x38] sm:$0xf]
      %v2788 = vld [vmem:[%s5 + $0x3c] sm:$0xf]
      %v2789 = vld [vmem:[%s5 + $0x40] sm:$0xf]
      %v2790 = vld [vmem:[%s5 + $0x44] sm:$0xf]
      %v2791 = vld [vmem:[%s5 + $0x48] sm:$0xf]
      %v2792 = vld [vmem:[%s5 + $0x4c] sm:$0xf]
      %v2793 = vld [vmem:[%s5 + $0x50] sm:$0xf]
      %v2794 = vld [vmem:[%s5 + $0x54] sm:$0xf]
      %v2795 = vld [vmem:[%s5 + $0x58] sm:$0xf]
      %v2796 = vld [vmem:[%s5 + $0x5c] sm:$0xf]
      %v2797 = vld [vmem:[%s5 + $0x60] sm:$0xf]
      %v2798 = vld [vmem:[%s5 + $0x64] sm:$0xf]
      %v2799 = vld [vmem:[%s5 + $0x68] sm:$0xf]
      %v2800 = vld [vmem:[%s5 + $0x6c] sm:$0xf]
      %v2801 = vld [vmem:[%s5 + $0x70] sm:$0xf]
      %v2802 = vld [vmem:[%s5 + $0x74] sm:$0xf]
      %v2803 = vld [vmem:[%s5 + $0x78] sm:$0xf]
      %v2804 = vld [vmem:[%s5 + $0x7c] sm:$0xf]
      %v2805 = vld [vmem:[%s5 + $0x80] sm:$0xf]
      %v2806 = vld [vmem:[%s5 + $0x84] sm:$0xf]
      %v2807 = vld [vmem:[%s5 + $0x88] sm:$0xf]
      %v2808 = vld [vmem:[%s5 + $0x8c] sm:$0xf]
      %v2809 = vld [vmem:[%s5 + $0x90] sm:$0xf]
      %v2810 = vld [vmem:[%s5 + $0x94] sm:$0xf]
      %v2811 = vld [vmem:[%s5 + $0x98] sm:$0xf]
      %v2812 = vld [vmem:[%s5 + $0x9c] sm:$0xf]
      %v2813 = vld [vmem:[%s5 + $0xa0] sm:$0xf]
      %v2814 = vld [vmem:[%s5 + $0xa4] sm:$0xf]
      %v2815 = vld [vmem:[%s5 + $0xa8] sm:$0xf]
      %v2816 = vld [vmem:[%s5 + $0xac] sm:$0xf]
      %v2817 = vld [vmem:[%s5 + $0xb0] sm:$0xf]
      %v2818 = vld [vmem:[%s5 + $0xb4] sm:$0xf]
      %v2819 = vld [vmem:[%s5 + $0xb8] sm:$0xf]
      %v2820 = vld [vmem:[%s5 + $0xbc] sm:$0xf]
      %v2821 = vld [vmem:[%s5 + $0xc0] sm:$0xf]
      %v2822 = vld [vmem:[%s5 + $0xc4] sm:$0xf]
      %v2823 = vld [vmem:[%s5 + $0xc8] sm:$0xf]
      %v2824 = vld [vmem:[%s5 + $0xcc] sm:$0xf]
      %v2825 = vld [vmem:[%s5 + $0xd0] sm:$0xf]
      %v2826 = vld [vmem:[%s5 + $0xd4] sm:$0xf]
      %v2827 = vld [vmem:[%s5 + $0xd8] sm:$0xf]
      %v2828 = vld [vmem:[%s5 + $0xdc] sm:$0xf]
      %v2829 = vld [vmem:[%s5 + $0xe0] sm:$0xf]
      %v2830 = vld [vmem:[%s5 + $0xe4] sm:$0xf]
      %v2831 = vld [vmem:[%s5 + $0xe8] sm:$0xf]
      %v2832 = vld [vmem:[%s5 + $0xec] sm:$0xf]
      %v2833 = vld [vmem:[%s5 + $0xf0] sm:$0xf]
      %v2834 = vld [vmem:[%s5 + $0xf4] sm:$0xf]
      %v2835 = vld [vmem:[%s5 + $0xf8] sm:$0xf]
      %v2836 = vld [vmem:[%s5 + $0xfc] sm:$0xf]
      %v2837 = vld [vmem:[%s6] sm:$0x1]
      %v2839 = vlaneseq
      %v2840 = vshrl.u32 %v2839, 7
      %v2841 = vsub.s32 0, %v2840
      %v2842 = vrot.slane %v2837, %v2841
      %v2908 = vunpack.c.l.b16 %v2773
      %v2909 = vunpack.c.l.b16 %v2774
      %v2910 = vunpack.c.l.b16 %v2775
      %v2911 = vunpack.c.l.b16 %v2776
      %v2912 = vunpack.c.l.b16 %v2777
      %v2913 = vunpack.c.l.b16 %v2778
      %v2914 = vunpack.c.l.b16 %v2779
      %v2915 = vunpack.c.l.b16 %v2780
      %v2916 = vunpack.c.l.b16 %v2781
      %v2917 = vunpack.c.l.b16 %v2782
      %v2918 = vunpack.c.l.b16 %v2783
      %v2919 = vunpack.c.l.b16 %v2784
      %v2920 = vunpack.c.l.b16 %v2785
      %v2921 = vunpack.c.l.b16 %v2786
      %v2922 = vunpack.c.l.b16 %v2787
      %v2923 = vunpack.c.l.b16 %v2788
      %v2924 = vunpack.c.l.b16 %v2789
      %v2925 = vunpack.c.l.b16 %v2790
      %v2926 = vunpack.c.l.b16 %v2791
      %v2927 = vunpack.c.l.b16 %v2792
      %v2928 = vunpack.c.l.b16 %v2793
      %v2929 = vunpack.c.l.b16 %v2794
      %v2930 = vunpack.c.l.b16 %v2795
      %v2931 = vunpack.c.l.b16 %v2796
      %v2932 = vunpack.c.l.b16 %v2797
      %v2933 = vunpack.c.l.b16 %v2798
      %v2934 = vunpack.c.l.b16 %v2799
      %v2935 = vunpack.c.l.b16 %v2800
      %v2936 = vunpack.c.l.b16 %v2801
      %v2937 = vunpack.c.l.b16 %v2802
      %v2938 = vunpack.c.l.b16 %v2803
      %v2939 = vunpack.c.l.b16 %v2804
      %v2940 = vunpack.c.l.b16 %v2805
      %v2941 = vunpack.c.l.b16 %v2806
      %v2942 = vunpack.c.l.b16 %v2807
      %v2943 = vunpack.c.l.b16 %v2808
      %v2944 = vunpack.c.l.b16 %v2809
      %v2945 = vunpack.c.l.b16 %v2810
      %v2946 = vunpack.c.l.b16 %v2811
      %v2947 = vunpack.c.l.b16 %v2812
      %v2948 = vunpack.c.l.b16 %v2813
      %v2949 = vunpack.c.l.b16 %v2814
      %v2950 = vunpack.c.l.b16 %v2815
      %v2951 = vunpack.c.l.b16 %v2816
      %v2952 = vunpack.c.l.b16 %v2817
      %v2953 = vunpack.c.l.b16 %v2818
      %v2954 = vunpack.c.l.b16 %v2819
      %v2955 = vunpack.c.l.b16 %v2820
      %v2956 = vunpack.c.l.b16 %v2821
      %v2957 = vunpack.c.l.b16 %v2822
      %v2958 = vunpack.c.l.b16 %v2823
      %v2959 = vunpack.c.l.b16 %v2824
      %v2960 = vunpack.c.l.b16 %v2825
      %v2961 = vunpack.c.l.b16 %v2826
      %v2962 = vunpack.c.l.b16 %v2827
      %v2963 = vunpack.c.l.b16 %v2828
      %v2964 = vunpack.c.l.b16 %v2829
      %v2965 = vunpack.c.l.b16 %v2830
      %v2966 = vunpack.c.l.b16 %v2831
      %v2967 = vunpack.c.l.b16 %v2832
      %v2968 = vunpack.c.l.b16 %v2833
      %v2969 = vunpack.c.l.b16 %v2834
      %v2970 = vunpack.c.l.b16 %v2835
      %v2971 = vunpack.c.l.b16 %v2836
      %v2972 = vpack.c.b16 %v2909, %v2908
      %v2973 = vpack.c.b16 %v2911, %v2910
      %v2974 = vpack.c.b16 %v2913, %v2912
      %v2975 = vpack.c.b16 %v2915, %v2914
      %v2976 = vpack.c.b16 %v2917, %v2916
      %v2977 = vpack.c.b16 %v2919, %v2918
      %v2978 = vpack.c.b16 %v2921, %v2920
      %v2979 = vpack.c.b16 %v2923, %v2922
      %v2980 = vpack.c.b16 %v2925, %v2924
      %v2981 = vpack.c.b16 %v2927, %v2926
      %v2982 = vpack.c.b16 %v2929, %v2928
      %v2983 = vpack.c.b16 %v2931, %v2930
      %v2984 = vpack.c.b16 %v2933, %v2932
      %v2985 = vpack.c.b16 %v2935, %v2934
      %v2986 = vpack.c.b16 %v2937, %v2936
      %v2987 = vpack.c.b16 %v2939, %v2938
      %v2988 = vpack.c.b16 %v2941, %v2940
      %v2989 = vpack.c.b16 %v2943, %v2942
      %v2990 = vpack.c.b16 %v2945, %v2944
      %v2991 = vpack.c.b16 %v2947, %v2946
      %v2992 = vpack.c.b16 %v2949, %v2948
      %v2993 = vpack.c.b16 %v2951, %v2950
      %v2994 = vpack.c.b16 %v2953, %v2952
      %v2995 = vpack.c.b16 %v2955, %v2954
      %v2996 = vpack.c.b16 %v2957, %v2956
      %v2997 = vpack.c.b16 %v2959, %v2958
      %v2998 = vpack.c.b16 %v2961, %v2960
      %v2999 = vpack.c.b16 %v2963, %v2962
      %v3000 = vpack.c.b16 %v2965, %v2964
      %v3001 = vpack.c.b16 %v2967, %v2966
      %v3002 = vpack.c.b16 %v2969, %v2968
      %v3003 = vpack.c.b16 %v2971, %v2970
      %3036 = vmatprep.subr.bf16.mxu0 0
      %3037 = vmatpush1.bf16.msra.mxu0 %v2972
      %3038 = vmatprep.subr.bf16.mxu0 0
      %3039 = vmatpush1.bf16.msra.mxu0 %v2973
      %3040 = vmatprep.subr.bf16.mxu0 0
      %3041 = vmatpush1.bf16.msra.mxu0 %v2974
      %3042 = vmatprep.subr.bf16.mxu0 0
      %3043 = vmatpush1.bf16.msra.mxu0 %v2975
      %3044 = vmatprep.subr.bf16.mxu0 0
      %3045 = vmatpush1.bf16.msra.mxu0 %v2976
      %3046 = vmatprep.subr.bf16.mxu0 0
      %3047 = vmatpush1.bf16.msra.mxu0 %v2977
      %3048 = vmatprep.subr.bf16.mxu0 0
      %3049 = vmatpush1.bf16.msra.mxu0 %v2978
      %3050 = vmatprep.subr.bf16.mxu0 0
      %3051 = vmatpush1.bf16.msra.mxu0 %v2979
      %3052 = vmatprep.subr.bf16.mxu0 0
      %3053 = vmatpush1.bf16.msra.mxu0 %v2980
      %3054 = vmatprep.subr.bf16.mxu0 0
      %3055 = vmatpush1.bf16.msra.mxu0 %v2981
      %3056 = vmatprep.subr.bf16.mxu0 0
      %3057 = vmatpush1.bf16.msra.mxu0 %v2982
      %3058 = vmatprep.subr.bf16.mxu0 0
      %3059 = vmatpush1.bf16.msra.mxu0 %v2983
      %3060 = vmatprep.subr.bf16.mxu0 0
      %3061 = vmatpush1.bf16.msra.mxu0 %v2984
      %3062 = vmatprep.subr.bf16.mxu0 0
      %3063 = vmatpush1.bf16.msra.mxu0 %v2985
      %3064 = vmatprep.subr.bf16.mxu0 0
      %3065 = vmatpush1.bf16.msra.mxu0 %v2986
      %3066 = vmatprep.subr.bf16.mxu0 0
      %3067 = vmatpush1.bf16.msra.mxu0 %v2987
      %3068 = vmatprep.mubr.bf16.mxu0 %v2770
      %3069 = vmatmul.mubr.bf16.gmra.mrb[0].mxu0 %v2769
      %v3070 = vpop.f32.mrb[0].mxu0
      %v3071 = vadd.f32 %v2842, %v3070
      %v3072 = vpop.f32.mrb[0].mxu0
      %v3073 = vpop.f32.mrb[0].mxu0
      %v3074 = vpop.f32.mrb[0].mxu0
      %3075 = vdwg.mxu0
      %3076 = vmatprep.subr.bf16.mxu0 0
      %3077 = vmatpush1.bf16.msra.mxu0 %v2988
      %3078 = vmatprep.subr.bf16.mxu0 0
      %3079 = vmatpush1.bf16.msra.mxu0 %v2989
      %3080 = vmatprep.subr.bf16.mxu0 0
      %3081 = vmatpush1.bf16.msra.mxu0 %v2990
      %3082 = vmatprep.subr.bf16.mxu0 0
      %3083 = vmatpush1.bf16.msra.mxu0 %v2991
      %3084 = vmatprep.subr.bf16.mxu0 0
      %3085 = vmatpush1.bf16.msra.mxu0 %v2992
      %3086 = vmatprep.subr.bf16.mxu0 0
      %3087 = vmatpush1.bf16.msra.mxu0 %v2993
      %3088 = vmatprep.subr.bf16.mxu0 0
      %3089 = vmatpush1.bf16.msra.mxu0 %v2994
      %3090 = vmatprep.subr.bf16.mxu0 0
      %3091 = vmatpush1.bf16.msra.mxu0 %v2995
      %3092 = vmatprep.subr.bf16.mxu0 0
      %3093 = vmatpush1.bf16.msra.mxu0 %v2996
      %3094 = vmatprep.subr.bf16.mxu0 0
      %3095 = vmatpush1.bf16.msra.mxu0 %v2997
      %3096 = vmatprep.subr.bf16.mxu0 0
      %3097 = vmatpush1.bf16.msra.mxu0 %v2998
      %3098 = vmatprep.subr.bf16.mxu0 0
      %3099 = vmatpush1.bf16.msra.mxu0 %v2999
      %3100 = vmatprep.subr.bf16.mxu0 0
      %3101 = vmatpush1.bf16.msra.mxu0 %v3000
      %3102 = vmatprep.subr.bf16.mxu0 0
      %3103 = vmatpush1.bf16.msra.mxu0 %v3001
      %3104 = vmatprep.subr.bf16.mxu0 0
      %3105 = vmatpush1.bf16.msra.mxu0 %v3002
      %3106 = vmatprep.subr.bf16.mxu0 0
      %3107 = vmatpush1.bf16.msra.mxu0 %v3003
      %3108 = vmatprep.mubr.bf16.mxu0 %v2772
      %3109 = vmatmul.mubr.bf16.gmra.mrb[0].mxu0 %v2771
      %v3110 = vpop.f32.mrb[0].mxu0
      %v3111 = vadd.f32 %v3071, %v3110
      %v3112 = vpop.f32.mrb[0].mxu0
      %v3113 = vpop.f32.mrb[0].mxu0
      %v3114 = vpop.f32.mrb[0].mxu0
      %3115 = vdwg.mxu0
      %3116 = vst [vmem:[#allocation6] sm:$0x3] %v3111
    $region41: #{tpu_custom_call.1} parent=1 // pred_fallthru
      _
    // Predicated region
    $region42: #{tpu_custom_call.1} parent=1 // pred_check
      _
    $region43: #{tpu_custom_call.1} parent=1 // pred_check_branch
      %3118 = sbr.rel (0) target = $region45
    $region44: #{tpu_custom_call.1} parent=1 // pred_region
      %s3120 = ssub.s32 32, 32
      %3121 = vsyncadd [#allocation5], %s3120
      %s3123 = sshll.u32 [#allocation6], 4
      %s3124 = int_to_ptr.vmem [resolvable:$true] %s3123
      %3126 = dma.vmem_to_hbm [thread:$0]  %s3124, 32, %s7, [#allocation5]
    $region45: #{tpu_custom_call.1} parent=1 // pred_fallthru
      _
    // Predicated region
    $region46: #{tpu_custom_call.1} parent=1 // pred_check
      _
    $region47: #{tpu_custom_call.1} parent=1 // pred_check_branch
      %3128 = sbr.rel (0) target = $region49
    $region48: #{tpu_custom_call.1} parent=1 // pred_region
      %3129 = dma.done [#allocation5], 32
    $region49: #{tpu_custom_call.1} parent=1 // pred_fallthru
      _
    %3130 = vsyncpa [#allocation4], 1
    %3131 = vsyncpa [#allocation5], 1

</llo_original>
